<compile_context>
chip_gen: v7x
topology: tpu7x:2x2x1
jax: 0.10.0
libtpu: 0.0.40
codegen_flags: <defaults>
</compile_context>

<pallas_src>
import jax
import jax.numpy as jnp
from jax import lax
from jax.experimental import pallas as pl
from jax.experimental.pallas import tpu as pltpu


# ----------------------------- Fused Pallas kernel --------------------------

def _shift_rows(v, kh, zero_row):
    """Rows (h + kh - 1) of v with a zero row outside [0, H) — i.e. the
    vertically zero-padded view needed for the kh-th tap of a SAME 3x3 conv."""
    if kh == 0:
        return jnp.concatenate([zero_row, v[:-1]], axis=0)
    if kh == 1:
        return v
    return jnp.concatenate([v[1:], zero_row], axis=0)


def _dense_layer_kernel(x_ref, w1_ref, b1_ref, w2_ref, b2_ref, w3_ref, b3_ref,
                        o1_ref, o2_ref):
    # x_ref : (1, H, W*Cin)              bf16   input slab (one image)
    # w1_ref: (W*Cin, (W+2)*2G)          bf16   block-diag fused 1x1 (both branches)
    # w2_ref: (3, (W+2)*2G, W*G+(W+2)*G) bf16   banded merged first 3x3 (per kh)
    # w3_ref: (3, (W+2)*G, W*G)          bf16   banded branch2 second 3x3 (per kh)
    # b*_ref: (1, cols)                  f32    folded BN biases (tiled per w)
    # o1_ref: (1, H, W*G)                f32    branch1 output slab
    # o2_ref: (1, H, W*G)                f32    branch2 output slab
    f32 = jnp.float32
    H = x_ref.shape[1]
    WG = o1_ref.shape[-1]

    # ---- stage 1: both branch 1x1 convs as ONE block-diagonal matmul.
    # Output lanes are already in padded positions: the zero weight columns
    # at the w borders + zero bias + ReLU give the horizontal zero border.
    x = x_ref[0]                                                   # (H, W*Cin)
    acc1 = jnp.dot(x, w1_ref[...], preferred_element_type=f32)
    y = jnp.maximum(acc1 + b1_ref[...], 0.0)                       # (H, (W+2)*2G)
    yb = y.astype(jnp.bfloat16)
    zrow1 = jnp.zeros((1, yb.shape[1]), jnp.bfloat16)

    # ---- stage 2: merged first 3x3 of both branches = 3 banded matmuls (kh).
    acc2 = jnp.zeros((H, w2_ref.shape[-1]), f32)
    for kh in range(3):
        acc2 += jnp.dot(_shift_rows(yb, kh, zrow1), w2_ref[kh],
                        preferred_element_type=f32)
    z = jnp.maximum(acc2 + b2_ref[...], 0.0)                       # (H, WG+(W+2)*G)

    # branch1 is done: lane-dense store (128-aligned slice).
    o1_ref[0] = z[:, :WG].astype(o1_ref.dtype)

    # branch2 intermediate, already in lane-padded positions (borders are 0).
    y2b = z[:, WG:].astype(jnp.bfloat16)                           # (H, (W+2)*G)
    zrow2 = jnp.zeros((1, y2b.shape[1]), jnp.bfloat16)

    # ---- stage 3: branch2's second 3x3 = 3 banded matmuls (kh).
    acc3 = jnp.zeros((H, WG), f32)
    for kh in range(3):
        acc3 += jnp.dot(_shift_rows(y2b, kh, zrow2), w3_ref[kh],
                        preferred_element_type=f32)
    o2_ref[0] = jnp.maximum(acc3 + b3_ref[...], 0.0).astype(o2_ref.dtype)


# ----------------------------- Weight banding helpers ------------------------

def _band_from_taps(taps, width):
    """taps: (3, Ci, Co) per-kw blocks.  Returns B of shape
    ((width+2)*Ci, width*Co) with B[(w+kw)*Ci + ci, w*Co + co] = taps[kw,ci,co],
    i.e. a SAME-padded 3-tap conv along the (lane-merged) W axis as a matmul."""
    _, Ci, Co = taps.shape
    D = jnp.zeros((width + 2, width, Ci, Co), taps.dtype)
    w_idx = jnp.arange(width)
    for kw in range(3):
        D = D.at[w_idx + kw, w_idx].set(taps[kw])
    return jnp.transpose(D, (0, 2, 1, 3)).reshape((width + 2) * Ci, width * Co)


def _blockdiag_1x1(block, width, out_pad):
    """block: (Ci, Co) 1x1 weight.  Returns B of shape
    (width*Ci, (width+2*out_pad)*Co) with the output of spatial column w
    placed at column-block (w + out_pad); the border column blocks are zero."""
    Ci, Co = block.shape
    wout = width + 2 * out_pad
    D = jnp.zeros((width, wout, Ci, Co), block.dtype)
    w_idx = jnp.arange(width)
    D = D.at[w_idx, w_idx + out_pad].set(block)
    return jnp.transpose(D, (0, 2, 1, 3)).reshape(width * Ci, wout * Co)


# ----------------------------- Wrapper ---------------------------------------

def dense_layer_forward(x_nchw, p):
    N, Cin, H, W = x_nchw.shape
    G = p["b1_w1"].shape[1]
    WG = W * G

    # Wrapper-side layout plumbing: NCHW -> (N, H, W*Cin) bf16 row slab.
    x_slab = jnp.transpose(x_nchw, (0, 2, 3, 1)).reshape(N, H, W * Cin)
    x_slab = x_slab.astype(jnp.bfloat16)

    s11, c11 = p["b1_bn1"]
    s12, c12 = p["b1_bn2"]
    s21, c21 = p["b2_bn1"]
    s22, c22 = p["b2_bn2"]
    s23, c23 = p["b2_bn3"]

    # Stage 1: both 1x1 convs (BN scale folded), outputs at padded lane slots.
    w1_both = jnp.concatenate([p["b1_w1"] * s11, p["b2_w1"] * s21], axis=1)
    w1_bd = _blockdiag_1x1(w1_both, W, out_pad=1).astype(jnp.bfloat16)
    bias1 = jnp.pad(jnp.tile(jnp.concatenate([c11, c21]), W), (2 * G, 2 * G))
    bias1 = bias1.reshape(1, -1).astype(jnp.float32)

    # Stage 2: merged first 3x3 of both branches (branch-block-diagonal band).
    zeros_gg = jnp.zeros((3, 3, G, G), jnp.float32)
    taps_b1 = jnp.concatenate([p["b1_w2"] * s12, zeros_gg], axis=2)   # (3,3,2G,G)
    taps_b2 = jnp.concatenate([zeros_gg, p["b2_w2"] * s22], axis=2)   # (3,3,2G,G)
    w2_bd = jnp.stack([
        jnp.concatenate([
            _band_from_taps(taps_b1[kh], W),                           # branch1 out (dense)
            jnp.pad(_band_from_taps(taps_b2[kh], W), ((0, 0), (G, G))),  # branch2 out (padded)
        ], axis=1)
        for kh in range(3)
    ]).astype(jnp.bfloat16)                                           # (3,(W+2)*2G, WG+(W+2)*G)
    bias2 = jnp.concatenate([jnp.tile(c12, W), jnp.pad(jnp.tile(c22, W), (G, G))])
    bias2 = bias2.reshape(1, -1).astype(jnp.float32)

    # Stage 3: branch2's second 3x3.
    w3_scaled = p["b2_w3"] * s23
    w3_bd = jnp.stack([_band_from_taps(w3_scaled[kh], W) for kh in range(3)])
    w3_bd = w3_bd.astype(jnp.bfloat16)                                # (3,(W+2)*G, WG)
    bias3 = jnp.tile(c23, W).reshape(1, -1).astype(jnp.float32)

    out1_slab, out2_slab = pl.pallas_call(
        _dense_layer_kernel,
        grid=(N,),
        in_specs=[
            pl.BlockSpec((1, H, W * Cin), lambda n: (n, 0, 0)),
            # Weights / biases: full blocks with constant index maps so they
            # stay resident in VMEM across grid steps (no per-step re-DMA).
            pl.BlockSpec(w1_bd.shape, lambda n: (0, 0)),
            pl.BlockSpec(bias1.shape, lambda n: (0, 0)),
            pl.BlockSpec(w2_bd.shape, lambda n: (0, 0, 0)),
            pl.BlockSpec(bias2.shape, lambda n: (0, 0)),
            pl.BlockSpec(w3_bd.shape, lambda n: (0, 0, 0)),
            pl.BlockSpec(bias3.shape, lambda n: (0, 0)),
        ],
        out_specs=[
            pl.BlockSpec((1, H, WG), lambda n: (n, 0, 0)),
            pl.BlockSpec((1, H, WG), lambda n: (n, 0, 0)),
        ],
        out_shape=[
            jax.ShapeDtypeStruct((N, H, WG), jnp.float32),
            jax.ShapeDtypeStruct((N, H, WG), jnp.float32),
        ],
        compiler_params=pltpu.CompilerParams(
            dimension_semantics=("parallel",)),
    )(x_slab, w1_bd, bias1, w2_bd, bias2, w3_bd, bias3)

    # Wrapper-side layout plumbing back to NCHW with torch.cat(dim=1) semantics.
    out1 = out1_slab.reshape(N, H, W, G)
    out2 = out2_slab.reshape(N, H, W, G)
    out = jnp.concatenate([out1, out2], axis=-1)
    return jnp.transpose(out, (0, 3, 1, 2))


# ----------------------------- Parameters ------------------------------------

def _bn_fold(gamma, beta, mean, var, eps=1e-5):
    scale = gamma / jnp.sqrt(var + eps)
    bias = beta - mean * scale
    return scale.astype(jnp.float32), bias.astype(jnp.float32)


def make_params(key, in_channels, growth_rate):
    keys = jax.random.split(key, 8)
    g = growth_rate

    def bn_params(c, i):
        r = jnp.arange(c, dtype=jnp.float32)
        gamma = 1.0 + 0.1 * r + 0.01 * i
        beta = 0.05 * r - 0.02 * i
        mean = 0.02 * r + 0.005 * i
        var = 1.0 + 0.03 * r + 0.01 * i
        return _bn_fold(gamma, beta, mean, var)

    p = {}
    # branch1: 1x1 conv -> BN -> ReLU -> 3x3 conv -> BN -> ReLU
    p["b1_w1"] = 0.2 * jax.random.normal(keys[0], (in_channels, g), jnp.float32)
    p["b1_bn1"] = bn_params(g, 0)
    p["b1_w2"] = 0.2 * jax.random.normal(keys[1], (3, 3, g, g), jnp.float32)  # HWIO
    p["b1_bn2"] = bn_params(g, 1)
    # branch2: 1x1 -> BN -> ReLU -> 3x3 -> BN -> ReLU -> 3x3 -> BN -> ReLU
    p["b2_w1"] = 0.2 * jax.random.normal(keys[2], (in_channels, g), jnp.float32)
    p["b2_bn1"] = bn_params(g, 2)
    p["b2_w2"] = 0.2 * jax.random.normal(keys[3], (3, 3, g, g), jnp.float32)
    p["b2_bn2"] = bn_params(g, 3)
    p["b2_w3"] = 0.2 * jax.random.normal(keys[4], (3, 3, g, g), jnp.float32)
    p["b2_bn3"] = bn_params(g, 4)
    return p


# ----------------------------- Pure-JAX reference ----------------------------
# Mirrors the kernel's numerics (BN scale folded into bf16 weights, bf16
# activations into each conv, f32 accumulation) so only accumulation order
# differs (~1e-5 level).

def _ref_conv1x1(x, w, scale, bias):
    y = jnp.einsum("nhwc,co->nhwo",
                   x.astype(jnp.bfloat16), (w * scale).astype(jnp.bfloat16),
                   preferred_element_type=jnp.float32)
    return jnp.maximum(y + bias, 0.0)


def _ref_conv3x3(x, w, scale, bias):
    y = lax.conv_general_dilated(
        x.astype(jnp.bfloat16), (w * scale).astype(jnp.bfloat16),
        window_strides=(1, 1), padding="SAME",
        dimension_numbers=("NHWC", "HWIO", "NHWC"),
        preferred_element_type=jnp.float32)
    return jnp.maximum(y + bias, 0.0)


def dense_layer_reference(x_nchw, p):
    x = jnp.transpose(x_nchw, (0, 2, 3, 1)).astype(jnp.float32)
    b1 = _ref_conv1x1(x, p["b1_w1"], *p["b1_bn1"])
    b1 = _ref_conv3x3(b1, p["b1_w2"], *p["b1_bn2"])
    b2 = _ref_conv1x1(x, p["b2_w1"], *p["b2_bn1"])
    b2 = _ref_conv3x3(b2, p["b2_w2"], *p["b2_bn2"])
    b2 = _ref_conv3x3(b2, p["b2_w3"], *p["b2_bn3"])
    out = jnp.concatenate([b1, b2], axis=-1)
    return jnp.transpose(out, (0, 3, 1, 2))


# ----------------------------- Main -------------------------------------------

if __name__ == "__main__":
    key = jax.random.PRNGKey(0)
    k_x, k_p = jax.random.split(key)

    batch, in_channels, H, W = 2, 4, 16, 16
    growth_rate = 8

    x = jax.random.normal(k_x, (batch, in_channels, H, W), jnp.float32)  # NCHW
    params = make_params(k_p, in_channels, growth_rate)

    out = jax.jit(dense_layer_forward)(x, params)
    out = jax.block_until_ready(out)

    assert out.shape == (batch, 2 * growth_rate, H, W), out.shape

    ref = jax.block_until_ready(dense_layer_reference(x, params))
    err = float(jnp.max(jnp.abs(out - ref)))
    assert err < 1e-2, f"max abs error {err}"

    print("KERNEL_OK")
</pallas_src>

<mosaic_0001>
module attributes {stable_mosaic.version = 11 : i64} {
  func.func @_dense_layer_kernel(%arg0: i32, %arg1: memref<1x16x64xbf16, #tpu.memory_space<vmem>>, %arg2: memref<64x288xbf16, #tpu.memory_space<vmem>>, %arg3: memref<1x288xf32, #tpu.memory_space<vmem>>, %arg4: memref<3x288x272xbf16, #tpu.memory_space<vmem>>, %arg5: memref<1x272xf32, #tpu.memory_space<vmem>>, %arg6: memref<3x144x128xbf16, #tpu.memory_space<vmem>>, %arg7: memref<1x128xf32, #tpu.memory_space<vmem>>, %arg8: memref<1x16x128xf32, #tpu.memory_space<vmem>>, %arg9: memref<1x16x128xf32, #tpu.memory_space<vmem>>) attributes {dimension_semantics = [#tpu.dimension_semantics<parallel>], iteration_bounds = array<i64: 2>, scalar_prefetch = 0 : i64, scratch_operands = 0 : i64, tpu.core_type = #tpu.core_type<tc>, window_params = [{transform_indices = @transform_0, window_bounds = array<i64: 1, 16, 64>}, {pipeline_mode = #tpu.pipeline_mode<synchronous>, transform_indices = @transform_1, window_bounds = array<i64: 64, 288>}, {pipeline_mode = #tpu.pipeline_mode<synchronous>, transform_indices = @transform_2, window_bounds = array<i64: 1, 288>}, {pipeline_mode = #tpu.pipeline_mode<synchronous>, transform_indices = @transform_3, window_bounds = array<i64: 3, 288, 272>}, {pipeline_mode = #tpu.pipeline_mode<synchronous>, transform_indices = @transform_4, window_bounds = array<i64: 1, 272>}, {pipeline_mode = #tpu.pipeline_mode<synchronous>, transform_indices = @transform_5, window_bounds = array<i64: 3, 144, 128>}, {pipeline_mode = #tpu.pipeline_mode<synchronous>, transform_indices = @transform_6, window_bounds = array<i64: 1, 128>}, {transform_indices = @transform_7, window_bounds = array<i64: 1, 16, 128>}, {transform_indices = @transform_8, window_bounds = array<i64: 1, 16, 128>}]} {
    %c0 = arith.constant 0 : index
    %c0_0 = arith.constant 0 : index
    %c0_1 = arith.constant 0 : index
    %0 = vector.load %arg1[%c0, %c0_0, %c0_1] : memref<1x16x64xbf16, #tpu.memory_space<vmem>>, vector<1x16x64xbf16>
    %1 = vector.shape_cast %0 : vector<1x16x64xbf16> to vector<16x64xbf16>
    %c0_2 = arith.constant 0 : index
    %c0_3 = arith.constant 0 : index
    %2 = vector.load %arg2[%c0_2, %c0_3] : memref<64x288xbf16, #tpu.memory_space<vmem>>, vector<64x288xbf16>
    %cst = arith.constant dense<0.000000e+00> : vector<16x288xf32>
    %3 = tpu.matmul %1, %2, %cst {dimension_numbers = #tpu.dot_dimension_numbers<[1], [0], [0], [1], [0, 0, 1, 1], [], []>} : vector<16x64xbf16>, vector<64x288xbf16>, vector<16x288xf32> -> vector<16x288xf32>
    %c0_4 = arith.constant 0 : index
    %c0_5 = arith.constant 0 : index
    %4 = vector.load %arg3[%c0_4, %c0_5] : memref<1x288xf32, #tpu.memory_space<vmem>>, vector<1x288xf32>
    %5 = vector.broadcast %4 : vector<1x288xf32> to vector<16x288xf32>
    %6 = arith.addf %3, %5 : vector<16x288xf32>
    %cst_6 = arith.constant 0.000000e+00 : f32
    %7 = vector.broadcast %cst_6 : f32 to vector<16x288xf32>
    %8 = arith.maximumf %6, %7 : vector<16x288xf32>
    %9 = arith.truncf %8 : vector<16x288xf32> to vector<16x288xbf16>
    %cst_7 = arith.constant 0.000000e+00 : bf16
    %10 = vector.broadcast %cst_7 : bf16 to vector<1x288xbf16>
    %cst_8 = arith.constant 0.000000e+00 : f32
    %11 = vector.broadcast %cst_8 : f32 to vector<16x272xf32>
    %12 = vector.extract_strided_slice %9 {offsets = [0, 0], sizes = [15, 288], strides = [1, 1]} : vector<16x288xbf16> to vector<15x288xbf16>
    %13 = tpu.concatenate %10, %12 in 0 : vector<1x288xbf16>, vector<15x288xbf16> -> vector<16x288xbf16>
    %c0_9 = arith.constant 0 : index
    %c0_10 = arith.constant 0 : index
    %c0_11 = arith.constant 0 : index
    %14 = vector.load %arg4[%c0_9, %c0_10, %c0_11] : memref<3x288x272xbf16, #tpu.memory_space<vmem>>, vector<1x288x272xbf16>
    %15 = vector.shape_cast %14 : vector<1x288x272xbf16> to vector<288x272xbf16>
    %cst_12 = arith.constant dense<0.000000e+00> : vector<16x272xf32>
    %16 = tpu.matmul %13, %15, %cst_12 {dimension_numbers = #tpu.dot_dimension_numbers<[1], [0], [0], [1], [0, 0, 1, 1], [], []>} : vector<16x288xbf16>, vector<288x272xbf16>, vector<16x272xf32> -> vector<16x272xf32>
    %17 = arith.addf %11, %16 : vector<16x272xf32>
    %c1 = arith.constant 1 : index
    %c0_13 = arith.constant 0 : index
    %c0_14 = arith.constant 0 : index
    %18 = vector.load %arg4[%c1, %c0_13, %c0_14] : memref<3x288x272xbf16, #tpu.memory_space<vmem>>, vector<1x288x272xbf16>
    %19 = vector.shape_cast %18 : vector<1x288x272xbf16> to vector<288x272xbf16>
    %cst_15 = arith.constant dense<0.000000e+00> : vector<16x272xf32>
    %20 = tpu.matmul %9, %19, %cst_15 {dimension_numbers = #tpu.dot_dimension_numbers<[1], [0], [0], [1], [0, 0, 1, 1], [], []>} : vector<16x288xbf16>, vector<288x272xbf16>, vector<16x272xf32> -> vector<16x272xf32>
    %21 = arith.addf %17, %20 : vector<16x272xf32>
    %22 = vector.extract_strided_slice %9 {offsets = [1, 0], sizes = [15, 288], strides = [1, 1]} : vector<16x288xbf16> to vector<15x288xbf16>
    %23 = tpu.concatenate %22, %10 in 0 : vector<15x288xbf16>, vector<1x288xbf16> -> vector<16x288xbf16>
    %c2 = arith.constant 2 : index
    %c0_16 = arith.constant 0 : index
    %c0_17 = arith.constant 0 : index
    %24 = vector.load %arg4[%c2, %c0_16, %c0_17] : memref<3x288x272xbf16, #tpu.memory_space<vmem>>, vector<1x288x272xbf16>
    %25 = vector.shape_cast %24 : vector<1x288x272xbf16> to vector<288x272xbf16>
    %cst_18 = arith.constant dense<0.000000e+00> : vector<16x272xf32>
    %26 = tpu.matmul %23, %25, %cst_18 {dimension_numbers = #tpu.dot_dimension_numbers<[1], [0], [0], [1], [0, 0, 1, 1], [], []>} : vector<16x288xbf16>, vector<288x272xbf16>, vector<16x272xf32> -> vector<16x272xf32>
    %27 = arith.addf %21, %26 : vector<16x272xf32>
    %c0_19 = arith.constant 0 : index
    %c0_20 = arith.constant 0 : index
    %28 = vector.load %arg5[%c0_19, %c0_20] : memref<1x272xf32, #tpu.memory_space<vmem>>, vector<1x272xf32>
    %29 = vector.broadcast %28 : vector<1x272xf32> to vector<16x272xf32>
    %30 = arith.addf %27, %29 : vector<16x272xf32>
    %cst_21 = arith.constant 0.000000e+00 : f32
    %31 = vector.broadcast %cst_21 : f32 to vector<16x272xf32>
    %32 = arith.maximumf %30, %31 : vector<16x272xf32>
    %33 = vector.extract_strided_slice %32 {offsets = [0, 0], sizes = [16, 128], strides = [1, 1]} : vector<16x272xf32> to vector<16x128xf32>
    %c0_22 = arith.constant 0 : index
    %c0_23 = arith.constant 0 : index
    %c0_24 = arith.constant 0 : index
    %34 = vector.load %arg8[%c0_22, %c0_23, %c0_24] : memref<1x16x128xf32, #tpu.memory_space<vmem>>, vector<1x16x128xf32>
    %35 = vector.shape_cast %34 : vector<1x16x128xf32> to vector<16x128xf32>
    %36 = vector.shape_cast %33 : vector<16x128xf32> to vector<1x16x128xf32>
    tpu.vector_store %arg8[%c0_22, %c0_23, %c0_24], %36 {strides = array<i32>} : memref<1x16x128xf32, #tpu.memory_space<vmem>>, vector<1x16x128xf32>,
    %37 = vector.extract_strided_slice %32 {offsets = [0, 128], sizes = [16, 144], strides = [1, 1]} : vector<16x272xf32> to vector<16x144xf32>
    %38 = arith.truncf %37 : vector<16x144xf32> to vector<16x144xbf16>
    %cst_25 = arith.constant 0.000000e+00 : bf16
    %39 = vector.broadcast %cst_25 : bf16 to vector<1x144xbf16>
    %cst_26 = arith.constant 0.000000e+00 : f32
    %40 = vector.broadcast %cst_26 : f32 to vector<16x128xf32>
    %41 = vector.extract_strided_slice %38 {offsets = [0, 0], sizes = [15, 144], strides = [1, 1]} : vector<16x144xbf16> to vector<15x144xbf16>
    %42 = tpu.concatenate %39, %41 in 0 : vector<1x144xbf16>, vector<15x144xbf16> -> vector<16x144xbf16>
    %c0_27 = arith.constant 0 : index
    %c0_28 = arith.constant 0 : index
    %c0_29 = arith.constant 0 : index
    %43 = vector.load %arg6[%c0_27, %c0_28, %c0_29] : memref<3x144x128xbf16, #tpu.memory_space<vmem>>, vector<1x144x128xbf16>
    %44 = vector.shape_cast %43 : vector<1x144x128xbf16> to vector<144x128xbf16>
    %cst_30 = arith.constant dense<0.000000e+00> : vector<16x128xf32>
    %45 = tpu.matmul %42, %44, %cst_30 {dimension_numbers = #tpu.dot_dimension_numbers<[1], [0], [0], [1], [0, 0, 1, 1], [], []>} : vector<16x144xbf16>, vector<144x128xbf16>, vector<16x128xf32> -> vector<16x128xf32>
    %46 = arith.addf %40, %45 : vector<16x128xf32>
    %c1_31 = arith.constant 1 : index
    %c0_32 = arith.constant 0 : index
    %c0_33 = arith.constant 0 : index
    %47 = vector.load %arg6[%c1_31, %c0_32, %c0_33] : memref<3x144x128xbf16, #tpu.memory_space<vmem>>, vector<1x144x128xbf16>
    %48 = vector.shape_cast %47 : vector<1x144x128xbf16> to vector<144x128xbf16>
    %cst_34 = arith.constant dense<0.000000e+00> : vector<16x128xf32>
    %49 = tpu.matmul %38, %48, %cst_34 {dimension_numbers = #tpu.dot_dimension_numbers<[1], [0], [0], [1], [0, 0, 1, 1], [], []>} : vector<16x144xbf16>, vector<144x128xbf16>, vector<16x128xf32> -> vector<16x128xf32>
    %50 = arith.addf %46, %49 : vector<16x128xf32>
    %51 = vector.extract_strided_slice %38 {offsets = [1, 0], sizes = [15, 144], strides = [1, 1]} : vector<16x144xbf16> to vector<15x144xbf16>
    %52 = tpu.concatenate %51, %39 in 0 : vector<15x144xbf16>, vector<1x144xbf16> -> vector<16x144xbf16>
    %c2_35 = arith.constant 2 : index
    %c0_36 = arith.constant 0 : index
    %c0_37 = arith.constant 0 : index
    %53 = vector.load %arg6[%c2_35, %c0_36, %c0_37] : memref<3x144x128xbf16, #tpu.memory_space<vmem>>, vector<1x144x128xbf16>
    %54 = vector.shape_cast %53 : vector<1x144x128xbf16> to vector<144x128xbf16>
    %cst_38 = arith.constant dense<0.000000e+00> : vector<16x128xf32>
    %55 = tpu.matmul %52, %54, %cst_38 {dimension_numbers = #tpu.dot_dimension_numbers<[1], [0], [0], [1], [0, 0, 1, 1], [], []>} : vector<16x144xbf16>, vector<144x128xbf16>, vector<16x128xf32> -> vector<16x128xf32>
    %56 = arith.addf %50, %55 : vector<16x128xf32>
    %c0_39 = arith.constant 0 : index
    %c0_40 = arith.constant 0 : index
    %57 = vector.load %arg7[%c0_39, %c0_40] : memref<1x128xf32, #tpu.memory_space<vmem>>, vector<1x128xf32>
    %58 = vector.broadcast %57 : vector<1x128xf32> to vector<16x128xf32>
    %59 = arith.addf %56, %58 : vector<16x128xf32>
    %cst_41 = arith.constant 0.000000e+00 : f32
    %60 = vector.broadcast %cst_41 : f32 to vector<16x128xf32>
    %61 = arith.maximumf %59, %60 : vector<16x128xf32>
    %c0_42 = arith.constant 0 : index
    %c0_43 = arith.constant 0 : index
    %c0_44 = arith.constant 0 : index
    %62 = vector.load %arg9[%c0_42, %c0_43, %c0_44] : memref<1x16x128xf32, #tpu.memory_space<vmem>>, vector<1x16x128xf32>
    %63 = vector.shape_cast %62 : vector<1x16x128xf32> to vector<16x128xf32>
    %64 = vector.shape_cast %61 : vector<16x128xf32> to vector<1x16x128xf32>
    tpu.vector_store %arg9[%c0_42, %c0_43, %c0_44], %64 {strides = array<i32>} : memref<1x16x128xf32, #tpu.memory_space<vmem>>, vector<1x16x128xf32>,
    return
  }
  func.func @transform_0(%arg0: i32) -> (i32, i32, i32) {
    %c0_i32 = arith.constant 0 : i32
    %c0_i32_0 = arith.constant 0 : i32
    %c0_i32_1 = arith.constant 0 : i32
    return %arg0, %c0_i32, %c0_i32_0 : i32, i32, i32
  }
  func.func @transform_1(%arg0: i32) -> (i32, i32) {
    %c0_i32 = arith.constant 0 : i32
    %c0_i32_0 = arith.constant 0 : i32
    %c0_i32_1 = arith.constant 0 : i32
    return %c0_i32, %c0_i32_0 : i32, i32
  }
  func.func @transform_2(%arg0: i32) -> (i32, i32) {
    %c0_i32 = arith.constant 0 : i32
    %c0_i32_0 = arith.constant 0 : i32
    %c0_i32_1 = arith.constant 0 : i32
    return %c0_i32, %c0_i32_0 : i32, i32
  }
  func.func @transform_3(%arg0: i32) -> (i32, i32, i32) {
    %c0_i32 = arith.constant 0 : i32
    %c0_i32_0 = arith.constant 0 : i32
    %c0_i32_1 = arith.constant 0 : i32
    %c0_i32_2 = arith.constant 0 : i32
    return %c0_i32, %c0_i32_0, %c0_i32_1 : i32, i32, i32
  }
  func.func @transform_4(%arg0: i32) -> (i32, i32) {
    %c0_i32 = arith.constant 0 : i32
    %c0_i32_0 = arith.constant 0 : i32
    %c0_i32_1 = arith.constant 0 : i32
    return %c0_i32, %c0_i32_0 : i32, i32
  }
  func.func @transform_5(%arg0: i32) -> (i32, i32, i32) {
    %c0_i32 = arith.constant 0 : i32
    %c0_i32_0 = arith.constant 0 : i32
    %c0_i32_1 = arith.constant 0 : i32
    %c0_i32_2 = arith.constant 0 : i32
    return %c0_i32, %c0_i32_0, %c0_i32_1 : i32, i32, i32
  }
  func.func @transform_6(%arg0: i32) -> (i32, i32) {
    %c0_i32 = arith.constant 0 : i32
    %c0_i32_0 = arith.constant 0 : i32
    %c0_i32_1 = arith.constant 0 : i32
    return %c0_i32, %c0_i32_0 : i32, i32
  }
  func.func @transform_7(%arg0: i32) -> (i32, i32, i32) {
    %c0_i32 = arith.constant 0 : i32
    %c0_i32_0 = arith.constant 0 : i32
    %c0_i32_1 = arith.constant 0 : i32
    return %arg0, %c0_i32, %c0_i32_0 : i32, i32, i32
  }
  func.func @transform_8(%arg0: i32) -> (i32, i32, i32) {
    %c0_i32 = arith.constant 0 : i32
    %c0_i32_0 = arith.constant 0 : i32
    %c0_i32_1 = arith.constant 0 : i32
    return %arg0, %c0_i32, %c0_i32_0 : i32, i32, i32
  }
}

</mosaic_0001>

<llo_original>
// kernel: tile.28
$region0: #{tile.28}
  #allocation0 [shape = 's32[1]{0}', space=sflag, size = 0x4, scoped, tag = 'scoped memory for tile.28']
  %s0 = inlined_call_operand.vmem [shape: f32[8], index: 0, kind: input, shape index: {}]
  %s1 = inlined_call_operand.vmem [shape: f32[16,8], index: 1, kind: output, shape index: {}]
  // Predicated region
  $region2: #{tile.28} parent=0 // pred_check
    _
  $region3: #{tile.28} parent=0 // pred_check_branch
    %3 = sbr.rel (0) target = $region5
  $region4: #{tile.28} parent=0 // pred_region
    _
  $region5: #{tile.28} parent=0 // pred_fallthru
    _
  %v4 = vld [vmem:[%s0] ss:$0 sm:$0xff]
  %5 = vst [vmem:[%s1] sm:$0xff] %v4
  %s6 = scalar_lea.vmem %s1, 8
  %7 = vst [vmem:[%s6] sm:$0xff] %v4

// kernel: tile.29
$region0: #{tile.29}
  %s0 = inlined_call_operand.vmem [shape: f32[16,8], index: 0, kind: input, shape index: {}]
  %s1 = inlined_call_operand.vmem [shape: f32[128], index: 1, kind: output, shape index: {}]
  $region1: #{tile.29} parent=0
    #allocation0 [shape = 'u8[4096]{0}', space=vmem, size = 0x1000, scoped, tag = 'scoped mem for output reshape']
    %v2 = vld [vmem:[%s0] sm:$0x1]
    %vm3 = vcmask 64512
    %4 = vst.msk [vmem:[#allocation0] sm:$0x1] %vm3, %v2
    %s5 = scalar_lea.vmem %s0, 15
    %v6 = vld [vmem:[%s5] sm:$0x1]
    %7 = vrot.lane.b32.xlu0 %v6, 120
    %v8 = vpop.permute.xlu0 %7
    %vm9 = vcmask 1048512
    %10 = vst.msk [vmem:[#allocation0] sm:$0x1] %vm9, %v8
    %s11 = scalar_lea.vmem %s0, 14
    %v12 = vld [vmem:[%s11] sm:$0x1]
    %13 = vrot.lane.b32.xlu0 %v12, 112
    %v14 = vpop.permute.xlu0 %13
    %vm15 = vcmask 982912
    %16 = vst.msk [vmem:[#allocation0] sm:$0x1] %vm15, %v14
    %s17 = scalar_lea.vmem %s0, 13
    %v18 = vld [vmem:[%s17] sm:$0x1]
    %19 = vrot.lane.b32.xlu0 %v18, 104
    %v20 = vpop.permute.xlu0 %19
    %vm21 = vcmask 917312
    %22 = vst.msk [vmem:[#allocation0] sm:$0x1] %vm21, %v20
    %s23 = scalar_lea.vmem %s0, 12
    %v24 = vld [vmem:[%s23] sm:$0x1]
    %25 = vrot.lane.b32.xlu0 %v24, 96
    %v26 = vpop.permute.xlu0 %25
    %vm27 = vcmask 851712
    %28 = vst.msk [vmem:[#allocation0] sm:$0x1] %vm27, %v26
    %s29 = scalar_lea.vmem %s0, 11
    %v30 = vld [vmem:[%s29] sm:$0x1]
    %31 = vrot.lane.b32.xlu0 %v30, 88
    %v32 = vpop.permute.xlu0 %31
    %vm33 = vcmask 786112
    %34 = vst.msk [vmem:[#allocation0] sm:$0x1] %vm33, %v32
    %s35 = scalar_lea.vmem %s0, 10
    %v36 = vld [vmem:[%s35] sm:$0x1]
    %37 = vrot.lane.b32.xlu0 %v36, 80
    %v38 = vpop.permute.xlu0 %37
    %vm39 = vcmask 720512
    %40 = vst.msk [vmem:[#allocation0] sm:$0x1] %vm39, %v38
    %s41 = scalar_lea.vmem %s0, 9
    %v42 = vld [vmem:[%s41] sm:$0x1]
    %43 = vrot.lane.b32.xlu0 %v42, 72
    %v44 = vpop.permute.xlu0 %43
    %vm45 = vcmask 654912
    %46 = vst.msk [vmem:[#allocation0] sm:$0x1] %vm45, %v44
    %s47 = scalar_lea.vmem %s0, 8
    %v48 = vld [vmem:[%s47] sm:$0x1]
    %49 = vrot.lane.b32.xlu0 %v48, 64
    %v50 = vpop.permute.xlu0 %49
    %vm51 = vcmask 589312
    %52 = vst.msk [vmem:[#allocation0] sm:$0x1] %vm51, %v50
    %s53 = scalar_lea.vmem %s0, 7
    %v54 = vld [vmem:[%s53] sm:$0x1]
    %55 = vrot.lane.b32.xlu0 %v54, 56
    %v56 = vpop.permute.xlu0 %55
    %vm57 = vcmask 523712
    %58 = vst.msk [vmem:[#allocation0] sm:$0x1] %vm57, %v56
    %s59 = scalar_lea.vmem %s0, 6
    %v60 = vld [vmem:[%s59] sm:$0x1]
    %61 = vrot.lane.b32.xlu0 %v60, 48
    %v62 = vpop.permute.xlu0 %61
    %vm63 = vcmask 458112
    %64 = vst.msk [vmem:[#allocation0] sm:$0x1] %vm63, %v62
    %s65 = scalar_lea.vmem %s0, 5
    %v66 = vld [vmem:[%s65] sm:$0x1]
    %67 = vrot.lane.b32.xlu0 %v66, 40
    %v68 = vpop.permute.xlu0 %67
    %vm69 = vcmask 392512
    %70 = vst.msk [vmem:[#allocation0] sm:$0x1] %vm69, %v68
    %s71 = scalar_lea.vmem %s0, 4
    %v72 = vld [vmem:[%s71] sm:$0x1]
    %73 = vrot.lane.b32.xlu0 %v72, 32
    %v74 = vpop.permute.xlu0 %73
    %vm75 = vcmask 326912
    %76 = vst.msk [vmem:[#allocation0] sm:$0x1] %vm75, %v74
    %s77 = scalar_lea.vmem %s0, 3
    %v78 = vld [vmem:[%s77] sm:$0x1]
    %79 = vrot.lane.b32.xlu0 %v78, 24
    %v80 = vpop.permute.xlu0 %79
    %vm81 = vcmask 261312
    %82 = vst.msk [vmem:[#allocation0] sm:$0x1] %vm81, %v80
    %s83 = scalar_lea.vmem %s0, 2
    %v84 = vld [vmem:[%s83] sm:$0x1]
    %85 = vrot.lane.b32.xlu0 %v84, 16
    %v86 = vpop.permute.xlu0 %85
    %vm87 = vcmask 195712
    %88 = vst.msk [vmem:[#allocation0] sm:$0x1] %vm87, %v86
    %s89 = scalar_lea.vmem %s0, 1
    %v90 = vld [vmem:[%s89] sm:$0x1]
    %91 = vrot.lane.b32.xlu0 %v90, 8
    %v92 = vpop.permute.xlu0 %91
    %vm93 = vcmask 130112
    %94 = vst.msk [vmem:[#allocation0] sm:$0x1] %vm93, %v92
    %s96 = sshllo.u32 0, 1
    %v98 = vld [vmem:[#allocation0] sm:%s96]
    %s99 = sshllo.u32 0, 1
    %100 = vst [vmem:[%s1] sm:%s99] %v98

// kernel: tile.23
$region0: #{tile.23}
  #allocation0 [shape = 's32[1]{0}', space=sflag, size = 0x4, scoped, tag = 'scoped memory for tile.23']
  %s0 = inlined_call_operand.vmem [shape: f32[16], index: 0, kind: input, shape index: {}]
  %s1 = inlined_call_operand.vmem [shape: f32[16,16], index: 1, kind: output, shape index: {}]
  // Predicated region
  $region2: #{tile.23} parent=0 // pred_check
    _
  $region3: #{tile.23} parent=0 // pred_check_branch
    %3 = sbr.rel (0) target = $region5
  $region4: #{tile.23} parent=0 // pred_region
    _
  $region5: #{tile.23} parent=0 // pred_fallthru
    _
  %v4 = vld [vmem:[%s0] ss:$0 sm:$0xff]
  %5 = vst [vmem:[%s1] sm:$0xff] %v4
  %s6 = scalar_lea.vmem %s1, 8
  %7 = vst [vmem:[%s6] sm:$0xff] %v4

// kernel: tile.24
$region0: #{tile.24}
  %s0 = inlined_call_operand.vmem [shape: f32[16,16], index: 0, kind: input, shape index: {}]
  %s1 = inlined_call_operand.vmem [shape: f32[256], index: 1, kind: output, shape index: {}]
  $region1: #{tile.24} parent=0
    #allocation0 [shape = 'u8[4096]{0}', space=vmem, size = 0x1000, scoped, tag = 'scoped mem for output reshape']
    %s2 = smov 3
    %v3 = vld [vmem:[%s0] ss:$8 sm:%s2]
    %vm4 = vcmask 130048
    %5 = vst.msk [vmem:[#allocation0] sm:$0x3] %vm4, %v3
    %s6 = scalar_lea.vmem %s0, 7
    %s7 = smov 3
    %v8 = vld [vmem:[%s6] ss:$8 sm:%s7]
    %9 = vrot.lane.b32.xlu0 %v8, 112
    %v10 = vpop.permute.xlu0 %9
    %vm11 = vcmask 1048448
    %12 = vst.msk [vmem:[#allocation0] sm:$0x3] %vm11, %v10
    %s13 = scalar_lea.vmem %s0, 6
    %s14 = smov 3
    %v15 = vld [vmem:[%s13] ss:$8 sm:%s14]
    %16 = vrot.lane.b32.xlu0 %v15, 96
    %v17 = vpop.permute.xlu0 %16
    %vm18 = vcmask 917248
    %19 = vst.msk [vmem:[#allocation0] sm:$0x3] %vm18, %v17
    %s20 = scalar_lea.vmem %s0, 5
    %s21 = smov 3
    %v22 = vld [vmem:[%s20] ss:$8 sm:%s21]
    %23 = vrot.lane.b32.xlu0 %v22, 80
    %v24 = vpop.permute.xlu0 %23
    %vm25 = vcmask 786048
    %26 = vst.msk [vmem:[#allocation0] sm:$0x3] %vm25, %v24
    %s27 = scalar_lea.vmem %s0, 4
    %s28 = smov 3
    %v29 = vld [vmem:[%s27] ss:$8 sm:%s28]
    %30 = vrot.lane.b32.xlu0 %v29, 64
    %v31 = vpop.permute.xlu0 %30
    %vm32 = vcmask 654848
    %33 = vst.msk [vmem:[#allocation0] sm:$0x3] %vm32, %v31
    %s34 = scalar_lea.vmem %s0, 3
    %s35 = smov 3
    %v36 = vld [vmem:[%s34] ss:$8 sm:%s35]
    %37 = vrot.lane.b32.xlu0 %v36, 48
    %v38 = vpop.permute.xlu0 %37
    %vm39 = vcmask 523648
    %40 = vst.msk [vmem:[#allocation0] sm:$0x3] %vm39, %v38
    %s41 = scalar_lea.vmem %s0, 2
    %s42 = smov 3
    %v43 = vld [vmem:[%s41] ss:$8 sm:%s42]
    %44 = vrot.lane.b32.xlu0 %v43, 32
    %v45 = vpop.permute.xlu0 %44
    %vm46 = vcmask 392448
    %47 = vst.msk [vmem:[#allocation0] sm:$0x3] %vm46, %v45
    %s48 = scalar_lea.vmem %s0, 1
    %s49 = smov 3
    %v50 = vld [vmem:[%s48] ss:$8 sm:%s49]
    %51 = vrot.lane.b32.xlu0 %v50, 16
    %v52 = vpop.permute.xlu0 %51
    %vm53 = vcmask 261248
    %54 = vst.msk [vmem:[#allocation0] sm:$0x3] %vm53, %v52
    %s56 = sshllo.u32 0, 2
    %v58 = vld [vmem:[#allocation0] sm:%s56]
    %s59 = sshllo.u32 0, 2
    %60 = vst [vmem:[%s1] sm:%s59] %v58

// kernel: tile.39
$region0: #{tile.39}
  %s0 = inlined_call_operand.vmem [shape: f32[16,8], index: 0, kind: input, shape index: {}]
  %s1 = inlined_call_operand.vmem [shape: f32[1,128], index: 1, kind: output, shape index: {}]
  $region1: #{tile.39} parent=0
    #allocation0 [shape = 'u8[4096]{0}', space=vmem, size = 0x1000, scoped, tag = 'scoped mem for output reshape']
    %v2 = vld [vmem:[%s0] sm:$0x1]
    %vm3 = vcmask 64512
    %4 = vst.msk [vmem:[#allocation0] sm:$0x1] %vm3, %v2
    %s5 = scalar_lea.vmem %s0, 15
    %v6 = vld [vmem:[%s5] sm:$0x1]
    %7 = vrot.lane.b32.xlu0 %v6, 120
    %v8 = vpop.permute.xlu0 %7
    %vm9 = vcmask 1048512
    %10 = vst.msk [vmem:[#allocation0] sm:$0x1] %vm9, %v8
    %s11 = scalar_lea.vmem %s0, 14
    %v12 = vld [vmem:[%s11] sm:$0x1]
    %13 = vrot.lane.b32.xlu0 %v12, 112
    %v14 = vpop.permute.xlu0 %13
    %vm15 = vcmask 982912
    %16 = vst.msk [vmem:[#allocation0] sm:$0x1] %vm15, %v14
    %s17 = scalar_lea.vmem %s0, 13
    %v18 = vld [vmem:[%s17] sm:$0x1]
    %19 = vrot.lane.b32.xlu0 %v18, 104
    %v20 = vpop.permute.xlu0 %19
    %vm21 = vcmask 917312
    %22 = vst.msk [vmem:[#allocation0] sm:$0x1] %vm21, %v20
    %s23 = scalar_lea.vmem %s0, 12
    %v24 = vld [vmem:[%s23] sm:$0x1]
    %25 = vrot.lane.b32.xlu0 %v24, 96
    %v26 = vpop.permute.xlu0 %25
    %vm27 = vcmask 851712
    %28 = vst.msk [vmem:[#allocation0] sm:$0x1] %vm27, %v26
    %s29 = scalar_lea.vmem %s0, 11
    %v30 = vld [vmem:[%s29] sm:$0x1]
    %31 = vrot.lane.b32.xlu0 %v30, 88
    %v32 = vpop.permute.xlu0 %31
    %vm33 = vcmask 786112
    %34 = vst.msk [vmem:[#allocation0] sm:$0x1] %vm33, %v32
    %s35 = scalar_lea.vmem %s0, 10
    %v36 = vld [vmem:[%s35] sm:$0x1]
    %37 = vrot.lane.b32.xlu0 %v36, 80
    %v38 = vpop.permute.xlu0 %37
    %vm39 = vcmask 720512
    %40 = vst.msk [vmem:[#allocation0] sm:$0x1] %vm39, %v38
    %s41 = scalar_lea.vmem %s0, 9
    %v42 = vld [vmem:[%s41] sm:$0x1]
    %43 = vrot.lane.b32.xlu0 %v42, 72
    %v44 = vpop.permute.xlu0 %43
    %vm45 = vcmask 654912
    %46 = vst.msk [vmem:[#allocation0] sm:$0x1] %vm45, %v44
    %s47 = scalar_lea.vmem %s0, 8
    %v48 = vld [vmem:[%s47] sm:$0x1]
    %49 = vrot.lane.b32.xlu0 %v48, 64
    %v50 = vpop.permute.xlu0 %49
    %vm51 = vcmask 589312
    %52 = vst.msk [vmem:[#allocation0] sm:$0x1] %vm51, %v50
    %s53 = scalar_lea.vmem %s0, 7
    %v54 = vld [vmem:[%s53] sm:$0x1]
    %55 = vrot.lane.b32.xlu0 %v54, 56
    %v56 = vpop.permute.xlu0 %55
    %vm57 = vcmask 523712
    %58 = vst.msk [vmem:[#allocation0] sm:$0x1] %vm57, %v56
    %s59 = scalar_lea.vmem %s0, 6
    %v60 = vld [vmem:[%s59] sm:$0x1]
    %61 = vrot.lane.b32.xlu0 %v60, 48
    %v62 = vpop.permute.xlu0 %61
    %vm63 = vcmask 458112
    %64 = vst.msk [vmem:[#allocation0] sm:$0x1] %vm63, %v62
    %s65 = scalar_lea.vmem %s0, 5
    %v66 = vld [vmem:[%s65] sm:$0x1]
    %67 = vrot.lane.b32.xlu0 %v66, 40
    %v68 = vpop.permute.xlu0 %67
    %vm69 = vcmask 392512
    %70 = vst.msk [vmem:[#allocation0] sm:$0x1] %vm69, %v68
    %s71 = scalar_lea.vmem %s0, 4
    %v72 = vld [vmem:[%s71] sm:$0x1]
    %73 = vrot.lane.b32.xlu0 %v72, 32
    %v74 = vpop.permute.xlu0 %73
    %vm75 = vcmask 326912
    %76 = vst.msk [vmem:[#allocation0] sm:$0x1] %vm75, %v74
    %s77 = scalar_lea.vmem %s0, 3
    %v78 = vld [vmem:[%s77] sm:$0x1]
    %79 = vrot.lane.b32.xlu0 %v78, 24
    %v80 = vpop.permute.xlu0 %79
    %vm81 = vcmask 261312
    %82 = vst.msk [vmem:[#allocation0] sm:$0x1] %vm81, %v80
    %s83 = scalar_lea.vmem %s0, 2
    %v84 = vld [vmem:[%s83] sm:$0x1]
    %85 = vrot.lane.b32.xlu0 %v84, 16
    %v86 = vpop.permute.xlu0 %85
    %vm87 = vcmask 195712
    %88 = vst.msk [vmem:[#allocation0] sm:$0x1] %vm87, %v86
    %s89 = scalar_lea.vmem %s0, 1
    %v90 = vld [vmem:[%s89] sm:$0x1]
    %91 = vrot.lane.b32.xlu0 %v90, 8
    %v92 = vpop.permute.xlu0 %91
    %vm93 = vcmask 130112
    %94 = vst.msk [vmem:[#allocation0] sm:$0x1] %vm93, %v92
    %s96 = sshllo.u32 0, 1
    %v98 = vld [vmem:[#allocation0] sm:%s96]
    %s99 = sshllo.u32 0, 1
    %100 = vst [vmem:[%s1] sm:%s99] %v98

// kernel: dense_layer_forward.1
$region0: #{dense_layer_forward.1}
  #allocation0 [shape = 'u32[]', space=smem, size = 0x4, offset = 0x4, fixed_abs, tag = 'smem constant byte address 0x4 - core index']
  #allocation1 [shape = 'u32[144,128]{1,0:T(1,128)}', space=vmem, size = 0x12000, scoped, tag = 'internal scratch']
  %s0 = inlined_call_operand.vmem [shape: bf16[2,16,64], index: 0, kind: input, shape index: {}]
  %s1 = inlined_call_operand.vmem [shape: bf16[64,288], index: 1, kind: input, shape index: {}]
  %s2 = inlined_call_operand.vmem [shape: f32[1,288], index: 2, kind: input, shape index: {}]
  %s3 = inlined_call_operand.vmem [shape: bf16[3,288,272], index: 3, kind: input, shape index: {}]
  %s4 = inlined_call_operand.vmem [shape: f32[1,272], index: 4, kind: input, shape index: {}]
  %s5 = inlined_call_operand.vmem [shape: bf16[3,144,128], index: 5, kind: input, shape index: {}]
  %s6 = inlined_call_operand.vmem [shape: f32[1,128], index: 6, kind: input, shape index: {}]
  %s7 = inlined_call_operand.vmem [shape: f32[2,16,128], index: 7, kind: output, shape index: {0}]
  %s8 = inlined_call_operand.vmem [shape: f32[2,16,128], index: 8, kind: output, shape index: {1}]
  %9 = xla_tuple %s7, %s8
  %s10 = sld [smem:[#allocation0]]
  $region69: #{dense_layer_forward.1} parent=0
    _
  %s12 = ssub.s32 1, %s10
  %s13 = scalar_select 0, %s12, %s10
  loop: start=0, step=1, limit=4
  $region2: #{dense_layer_forward.1} parent=0 // loop_pre_header
    _
  $region3: #{dense_layer_forward.1} parent=0 // loop_header
    %s15 = sphi 0, %s19
    %p16 = scmp.ge.s32.totalorder %s15, 4
    %s25 = sphi 0, %s27
    %s28 = sphi 0, %s25
    %s29 = sphi 0, %s28
    %s45 = sphi 0, %s29
    %s49 = sphi 0, %s49
    %s51 = sphi 0, %s49
    %s52 = sphi 0, %s51
    %s66 = sphi 0, %s52
    %s70 = sphi 0, %s70
    %s72 = sphi 0, %s70
    %s73 = sphi 0, %s72
    %s87 = sphi 0, %s73
    %s91 = sphi 0, %s91
    %s93 = sphi 0, %s91
    %s94 = sphi 0, %s93
    %s108 = sphi 0, %s94
    %s112 = sphi 0, %s112
    %s114 = sphi 0, %s112
    %s115 = sphi 0, %s114
    %s129 = sphi 0, %s115
    %s133 = sphi 0, %s133
    %s135 = sphi 0, %s133
    %s136 = sphi 0, %s135
    %s150 = sphi 0, %s136
    %s154 = sphi 0, %s154
    %s156 = sphi 0, %s154
    %s157 = sphi 0, %s156
    %s171 = sphi 0, %s157
    %s177 = sphi 0, %s179
    %s180 = sphi 0, %s177
    %s181 = sphi 0, %s180
    %s197 = sphi 0, %s181
    %s203 = sphi 0, %s205
    %s206 = sphi 0, %s203
    %s207 = sphi 0, %s206
    %s223 = sphi 0, %s207
  $region4: #{dense_layer_forward.1} parent=0 // loop_header_branch
    %18 = sbr.rel (%p16) target = $region8
  $region5: #{dense_layer_forward.1} parent=0 // loop_body
    %s20 = ssub.s32 %s15, 1
    %s21 = ssub.s32 %s15, 2
    %s22 = sadd.s32 %s15, 1
    %s23 = ssub.s32 %s15, %s22
    %p24 = scmp.eq.s32.totalorder %s23, 0
    %s26 = sadd.s32 %s25, 1
    %s27 = scalar_select %p24, %s25, %s26
    %p30 = pneg %p24
    %p31 = scmp.eq.s32.totalorder %s15, 1
    %p32 = por %p30, %p31
    %p33 = scmp.ne.s32.totalorder %s25, %s28
    %p34 = scmp.eq.s32.totalorder %s15, 0
    %p35 = por %p33, %p34
    %p36 = scmp.ne.s32.totalorder %s25, %s28
    %p37 = scmp.eq.s32.totalorder %s20, 1
    %p38 = por %p36, %p37
    %p39 = scmp.ne.s32.totalorder %s28, %s29
    %p40 = scmp.eq.s32.totalorder %s20, 0
    %p41 = por %p39, %p40
    %p42 = scmp.ne.s32.totalorder %s28, %s29
    %p43 = scmp.eq.s32.totalorder %s21, 1
    %p44 = por %p42, %p43
    %p46 = scmp.ne.s32.totalorder %s29, %s45
    %p47 = scmp.eq.s32.totalorder %s21, 0
    %p48 = por %p46, %p47
    %s50 = sadd.s32 %s49, 1
    %p53 = scmp.eq.s32.totalorder %s15, 1
    %p54 = scmp.ne.s32.totalorder %s49, %s51
    %p55 = scmp.eq.s32.totalorder %s15, 0
    %p56 = por %p54, %p55
    %p57 = scmp.ne.s32.totalorder %s49, %s51
    %p58 = scmp.eq.s32.totalorder %s20, 1
    %p59 = por %p57, %p58
    %p60 = scmp.ne.s32.totalorder %s51, %s52
    %p61 = scmp.eq.s32.totalorder %s20, 0
    %p62 = por %p60, %p61
    %p63 = scmp.ne.s32.totalorder %s51, %s52
    %p64 = scmp.eq.s32.totalorder %s21, 1
    %p65 = por %p63, %p64
    %p67 = scmp.ne.s32.totalorder %s52, %s66
    %p68 = scmp.eq.s32.totalorder %s21, 0
    %p69 = por %p67, %p68
    %s71 = sadd.s32 %s70, 1
    %p74 = scmp.eq.s32.totalorder %s15, 1
    %p75 = scmp.ne.s32.totalorder %s70, %s72
    %p76 = scmp.eq.s32.totalorder %s15, 0
    %p77 = por %p75, %p76
    %p78 = scmp.ne.s32.totalorder %s70, %s72
    %p79 = scmp.eq.s32.totalorder %s20, 1
    %p80 = por %p78, %p79
    %p81 = scmp.ne.s32.totalorder %s72, %s73
    %p82 = scmp.eq.s32.totalorder %s20, 0
    %p83 = por %p81, %p82
    %p84 = scmp.ne.s32.totalorder %s72, %s73
    %p85 = scmp.eq.s32.totalorder %s21, 1
    %p86 = por %p84, %p85
    %p88 = scmp.ne.s32.totalorder %s73, %s87
    %p89 = scmp.eq.s32.totalorder %s21, 0
    %p90 = por %p88, %p89
    %s92 = sadd.s32 %s91, 1
    %p95 = scmp.eq.s32.totalorder %s15, 1
    %p96 = scmp.ne.s32.totalorder %s91, %s93
    %p97 = scmp.eq.s32.totalorder %s15, 0
    %p98 = por %p96, %p97
    %p99 = scmp.ne.s32.totalorder %s91, %s93
    %p100 = scmp.eq.s32.totalorder %s20, 1
    %p101 = por %p99, %p100
    %p102 = scmp.ne.s32.totalorder %s93, %s94
    %p103 = scmp.eq.s32.totalorder %s20, 0
    %p104 = por %p102, %p103
    %p105 = scmp.ne.s32.totalorder %s93, %s94
    %p106 = scmp.eq.s32.totalorder %s21, 1
    %p107 = por %p105, %p106
    %p109 = scmp.ne.s32.totalorder %s94, %s108
    %p110 = scmp.eq.s32.totalorder %s21, 0
    %p111 = por %p109, %p110
    %s113 = sadd.s32 %s112, 1
    %p116 = scmp.eq.s32.totalorder %s15, 1
    %p117 = scmp.ne.s32.totalorder %s112, %s114
    %p118 = scmp.eq.s32.totalorder %s15, 0
    %p119 = por %p117, %p118
    %p120 = scmp.ne.s32.totalorder %s112, %s114
    %p121 = scmp.eq.s32.totalorder %s20, 1
    %p122 = por %p120, %p121
    %p123 = scmp.ne.s32.totalorder %s114, %s115
    %p124 = scmp.eq.s32.totalorder %s20, 0
    %p125 = por %p123, %p124
    %p126 = scmp.ne.s32.totalorder %s114, %s115
    %p127 = scmp.eq.s32.totalorder %s21, 1
    %p128 = por %p126, %p127
    %p130 = scmp.ne.s32.totalorder %s115, %s129
    %p131 = scmp.eq.s32.totalorder %s21, 0
    %p132 = por %p130, %p131
    %s134 = sadd.s32 %s133, 1
    %p137 = scmp.eq.s32.totalorder %s15, 1
    %p138 = scmp.ne.s32.totalorder %s133, %s135
    %p139 = scmp.eq.s32.totalorder %s15, 0
    %p140 = por %p138, %p139
    %p141 = scmp.ne.s32.totalorder %s133, %s135
    %p142 = scmp.eq.s32.totalorder %s20, 1
    %p143 = por %p141, %p142
    %p144 = scmp.ne.s32.totalorder %s135, %s136
    %p145 = scmp.eq.s32.totalorder %s20, 0
    %p146 = por %p144, %p145
    %p147 = scmp.ne.s32.totalorder %s135, %s136
    %p148 = scmp.eq.s32.totalorder %s21, 1
    %p149 = por %p147, %p148
    %p151 = scmp.ne.s32.totalorder %s136, %s150
    %p152 = scmp.eq.s32.totalorder %s21, 0
    %p153 = por %p151, %p152
    %s155 = sadd.s32 %s154, 1
    %p158 = scmp.eq.s32.totalorder %s15, 1
    %p159 = scmp.ne.s32.totalorder %s154, %s156
    %p160 = scmp.eq.s32.totalorder %s15, 0
    %p161 = por %p159, %p160
    %p162 = scmp.ne.s32.totalorder %s154, %s156
    %p163 = scmp.eq.s32.totalorder %s20, 1
    %p164 = por %p162, %p163
    %p165 = scmp.ne.s32.totalorder %s156, %s157
    %p166 = scmp.eq.s32.totalorder %s20, 0
    %p167 = por %p165, %p166
    %p168 = scmp.ne.s32.totalorder %s156, %s157
    %p169 = scmp.eq.s32.totalorder %s21, 1
    %p170 = por %p168, %p169
    %p172 = scmp.ne.s32.totalorder %s157, %s171
    %p173 = scmp.eq.s32.totalorder %s21, 0
    %p174 = por %p172, %p173
    %s175 = ssub.s32 %s15, %s22
    %p176 = scmp.eq.s32.totalorder %s175, 0
    %s178 = sadd.s32 %s177, 1
    %s179 = scalar_select %p176, %s177, %s178
    %p182 = pneg %p176
    %p183 = scmp.eq.s32.totalorder %s15, 1
    %p184 = por %p182, %p183
    %p185 = scmp.ne.s32.totalorder %s177, %s180
    %p186 = scmp.eq.s32.totalorder %s15, 0
    %p187 = por %p185, %p186
    %p188 = scmp.ne.s32.totalorder %s177, %s180
    %p189 = scmp.eq.s32.totalorder %s20, 1
    %p190 = por %p188, %p189
    %p191 = scmp.ne.s32.totalorder %s180, %s181
    %p192 = scmp.eq.s32.totalorder %s20, 0
    %p193 = por %p191, %p192
    %p194 = scmp.ne.s32.totalorder %s180, %s181
    %p195 = scmp.eq.s32.totalorder %s21, 1
    %p196 = por %p194, %p195
    %p198 = scmp.ne.s32.totalorder %s181, %s197
    %p199 = scmp.eq.s32.totalorder %s21, 0
    %p200 = por %p198, %p199
    %s201 = ssub.s32 %s15, %s22
    %p202 = scmp.eq.s32.totalorder %s201, 0
    %s204 = sadd.s32 %s203, 1
    %s205 = scalar_select %p202, %s203, %s204
    %p208 = pneg %p202
    %p209 = scmp.eq.s32.totalorder %s15, 1
    %p210 = por %p208, %p209
    %p211 = scmp.ne.s32.totalorder %s203, %s206
    %p212 = scmp.eq.s32.totalorder %s15, 0
    %p213 = por %p211, %p212
    %p214 = scmp.ne.s32.totalorder %s203, %s206
    %p215 = scmp.eq.s32.totalorder %s20, 1
    %p216 = por %p214, %p215
    %p217 = scmp.ne.s32.totalorder %s206, %s207
    %p218 = scmp.eq.s32.totalorder %s20, 0
    %p219 = por %p217, %p218
    %p220 = scmp.ne.s32.totalorder %s206, %s207
    %p221 = scmp.eq.s32.totalorder %s21, 1
    %p222 = por %p220, %p221
    %p224 = scmp.ne.s32.totalorder %s207, %s223
    %p225 = scmp.eq.s32.totalorder %s21, 0
    %p226 = por %p224, %p225
    %p227 = scmp.le.s32.totalorder 1, %s15
    %p228 = scmp.lt.s32.totalorder %s15, 3
    %p229 = pnand %p227, %p228
    %p230 = pneg %p229
    // Predicated region
    $region9: #{dense_layer_forward.1} parent=5 // pred_check
      _
    $region10: #{dense_layer_forward.1} parent=5 // pred_check_branch
      %232 = sbr.rel (%p229) target = $region12
    $region11: #{dense_layer_forward.1} parent=5 // pred_region
      %s233 = ssub.s32 %s15, 1
      // Predicated region
      $region13: #{dense_layer_forward.1} parent=11 // pred_check
        %p234 = pneg %p62
      $region14: #{dense_layer_forward.1} parent=11 // pred_check_branch
        %236 = sbr.rel (%p234) target = $region16
      $region15: #{dense_layer_forward.1} parent=11 // pred_region
        _
      $region16: #{dense_layer_forward.1} parent=11 // pred_fallthru
        _
      // Predicated region
      $region17: #{dense_layer_forward.1} parent=11 // pred_check
        %p237 = pneg %p83
      $region18: #{dense_layer_forward.1} parent=11 // pred_check_branch
        %239 = sbr.rel (%p237) target = $region20
      $region19: #{dense_layer_forward.1} parent=11 // pred_region
        _
      $region20: #{dense_layer_forward.1} parent=11 // pred_fallthru
        _
      // Predicated region
      $region21: #{dense_layer_forward.1} parent=11 // pred_check
        %p240 = pneg %p104
      $region22: #{dense_layer_forward.1} parent=11 // pred_check_branch
        %242 = sbr.rel (%p240) target = $region24
      $region23: #{dense_layer_forward.1} parent=11 // pred_region
        _
      $region24: #{dense_layer_forward.1} parent=11 // pred_fallthru
        _
      // Predicated region
      $region25: #{dense_layer_forward.1} parent=11 // pred_check
        %p243 = pneg %p125
      $region26: #{dense_layer_forward.1} parent=11 // pred_check_branch
        %245 = sbr.rel (%p243) target = $region28
      $region27: #{dense_layer_forward.1} parent=11 // pred_region
        _
      $region28: #{dense_layer_forward.1} parent=11 // pred_fallthru
        _
      // Predicated region
      $region29: #{dense_layer_forward.1} parent=11 // pred_check
        %p246 = pneg %p146
      $region30: #{dense_layer_forward.1} parent=11 // pred_check_branch
        %248 = sbr.rel (%p246) target = $region32
      $region31: #{dense_layer_forward.1} parent=11 // pred_region
        _
      $region32: #{dense_layer_forward.1} parent=11 // pred_fallthru
        _
      // Predicated region
      $region33: #{dense_layer_forward.1} parent=11 // pred_check
        %p249 = pneg %p167
      $region34: #{dense_layer_forward.1} parent=11 // pred_check_branch
        %251 = sbr.rel (%p249) target = $region36
      $region35: #{dense_layer_forward.1} parent=11 // pred_region
        _
      $region36: #{dense_layer_forward.1} parent=11 // pred_fallthru
        _
    $region12: #{dense_layer_forward.1} parent=5 // pred_fallthru
      _
    %p252 = scmp.lt.s32.totalorder %s15, 2
    // Predicated region
    $region37: #{dense_layer_forward.1} parent=5 // pred_check
      %p253 = pneg %p252
    $region38: #{dense_layer_forward.1} parent=5 // pred_check_branch
      %255 = sbr.rel (%p253) target = $region40
    $region39: #{dense_layer_forward.1} parent=5 // pred_region
      // Predicated region
      $region41: #{dense_layer_forward.1} parent=39 // pred_check
        %p256 = pneg %p35
      $region42: #{dense_layer_forward.1} parent=39 // pred_check_branch
        %258 = sbr.rel (%p256) target = $region44
      $region43: #{dense_layer_forward.1} parent=39 // pred_region
        %p259 = scmp.lt.s32.totalorder %s15, 1
        %s260 = scalar_select %p259, %s15, 1
        %s261 = smul.addr %s260, 2
        %s262 = smul.addr %s261, 4
        %s263 = scalar_lea.vmem %s0, %s262
      $region44: #{dense_layer_forward.1} parent=39 // pred_fallthru
        _
    $region40: #{dense_layer_forward.1} parent=5 // pred_fallthru
      _
    %p264 = scmp.le.s32.totalorder 1, %s15
    %p265 = scmp.lt.s32.totalorder %s15, 3
    %p266 = pnand %p264, %p265
    %p267 = pneg %p266
    // Predicated region
    $region45: #{dense_layer_forward.1} parent=5 // pred_check
      _
    $region46: #{dense_layer_forward.1} parent=5 // pred_check_branch
      %269 = sbr.rel (%p266) target = $region48
    $region47: #{dense_layer_forward.1} parent=5 // pred_region
      %s270 = ssub.s32 %s15, 1
      %p271 = scmp.lt.s32.totalorder %s20, 1
      %s272 = scalar_select %p271, %s20, 1
      %s273 = smul.addr %s272, 2
      %s274 = smul.addr %s273, 4
      %s275 = scalar_lea.vmem %s0, %s274
      %p276 = pneg %p41
      %p277 = pneg %p38
      %p278 = pneg %p62
      %p279 = pneg %p59
      %p280 = pneg %p83
      %p281 = pneg %p80
      %p282 = pneg %p104
      %p283 = pneg %p101
      %p284 = pneg %p125
      %p285 = pneg %p122
      %p286 = pneg %p146
      %p287 = pneg %p143
      %p288 = pneg %p167
      %p289 = pneg %p164
      %p290 = pneg %p193
      %p291 = pneg %p190
      %p292 = scmp.lt.s32.totalorder %s20, 1
      %s293 = scalar_select %p292, %s20, 1
      %s294 = smul.addr %s293, 2
      %s295 = smul.addr %s294, 8
      %s296 = scalar_lea.vmem %s7, %s295
      %p297 = pneg %p219
      %p298 = pneg %p216
      %p299 = scmp.lt.s32.totalorder %s20, 1
      %s300 = scalar_select %p299, %s20, 1
      %s301 = smul.addr %s300, 2
      %s302 = smul.addr %s301, 8
      %s303 = scalar_lea.vmem %s8, %s302
      %p304 = scmp.lt.s32.totalorder %s20, 1
      %s305 = scalar_select %p304, %s20, 1
      %s306 = smul.addr %s305, 2
      %s307 = smul.addr %s306, 4
      %s308 = scalar_lea.vmem %s0, %s307
      %p309 = scmp.lt.s32.totalorder %s20, 1
      %s310 = scalar_select %p309, %s20, 1
      %s311 = smul.addr %s310, 2
      %s312 = smul.addr %s311, 8
      %s313 = scalar_lea.vmem %s7, %s312
      %p314 = scmp.lt.s32.totalorder %s20, 1
      %s315 = scalar_select %p314, %s20, 1
      %s316 = smul.addr %s315, 2
      %s317 = smul.addr %s316, 8
      %s318 = scalar_lea.vmem %s8, %s317
      %v320 = vld [vmem:[%s308] sm:$0xf]
      %v321 = vld [vmem:[%s308 + $0x4] sm:$0xf]
      %v322 = vld [vmem:[%s1] sm:$0xff]
      %v323 = vld [vmem:[%s1 + $0x8] sm:$0xf]
      %v324 = vld [vmem:[%s1 + $0xc] sm:$0xff]
      %v325 = vld [vmem:[%s1 + $0x14] sm:$0xf]
      %v326 = vld [vmem:[%s1 + $0x18] sm:$0xff]
      %v327 = vld [vmem:[%s1 + $0x20] sm:$0xf]
      %v328 = vld [vmem:[%s1 + $0x24] sm:$0xff]
      %v329 = vld [vmem:[%s1 + $0x2c] sm:$0xf]
      %v330 = vld [vmem:[%s1 + $0x30] sm:$0xff]
      %v331 = vld [vmem:[%s1 + $0x38] sm:$0xf]
      %v332 = vld [vmem:[%s1 + $0x3c] sm:$0xff]
      %v333 = vld [vmem:[%s1 + $0x44] sm:$0xf]
      %v334 = vld [vmem:[%s1 + $0x48] sm:$0xff]
      %v335 = vld [vmem:[%s1 + $0x50] sm:$0xf]
      %v336 = vld [vmem:[%s1 + $0x54] sm:$0xff]
      %v337 = vld [vmem:[%s1 + $0x5c] sm:$0xf]
      %v338 = vld [vmem:[%s2] sm:$0x7]
      %v340 = vlaneseq
      %v341 = vshrl.u32 %v340, 7
      %v342 = vsub.s32 0, %v341
      %v343 = vrot.slane %v338, %v342
      %v344 = vlaneseq
      %v345 = vshrl.u32 %v344, 7
      %v346 = vsub.s32 1, %v345
      %v347 = vrot.slane %v338, %v346
      %v348 = vlaneseq
      %v349 = vshrl.u32 %v348, 7
      %v350 = vsub.s32 2, %v349
      %v351 = vrot.slane %v338, %v350
      %v357 = vunpack.c.l.b16 %v320
      %v358 = vunpack.c.l.b16 %v321
      %v359 = vpack.c.b16 %v358, %v357
      %v376 = vunpack.c.l.b16 %v322
      %v377 = vunpack.c.h.b16 %v322
      %v378 = vunpack.c.l.b16 %v323
      %v379 = vunpack.c.l.b16 %v324
      %v380 = vunpack.c.h.b16 %v324
      %v381 = vunpack.c.l.b16 %v325
      %v382 = vunpack.c.l.b16 %v326
      %v383 = vunpack.c.h.b16 %v326
      %v384 = vunpack.c.l.b16 %v327
      %v385 = vunpack.c.l.b16 %v328
      %v386 = vunpack.c.h.b16 %v328
      %v387 = vunpack.c.l.b16 %v329
      %v388 = vunpack.c.l.b16 %v330
      %v389 = vunpack.c.h.b16 %v330
      %v390 = vunpack.c.l.b16 %v331
      %v391 = vunpack.c.l.b16 %v332
      %v392 = vunpack.c.h.b16 %v332
      %v393 = vunpack.c.l.b16 %v333
      %v394 = vunpack.c.l.b16 %v334
      %v395 = vunpack.c.h.b16 %v334
      %v396 = vunpack.c.l.b16 %v335
      %v397 = vunpack.c.l.b16 %v336
      %v398 = vunpack.c.h.b16 %v336
      %v399 = vunpack.c.l.b16 %v337
      %v400 = vpack.c.b16 %v379, %v376
      %v401 = vpack.c.b16 %v380, %v377
      %v402 = vpack.c.b16 %v381, %v378
      %v403 = vpack.c.b16 %v385, %v382
      %v404 = vpack.c.b16 %v386, %v383
      %v405 = vpack.c.b16 %v387, %v384
      %v406 = vpack.c.b16 %v391, %v388
      %v407 = vpack.c.b16 %v392, %v389
      %v408 = vpack.c.b16 %v393, %v390
      %v409 = vpack.c.b16 %v397, %v394
      %v410 = vpack.c.b16 %v398, %v395
      %v411 = vpack.c.b16 %v399, %v396
      %vm424 = vcmask 523264
      %v426 = vsel %vm424, %v359, 0
      %428 = vmatprep.subr.bf16.mxu0 %v401
      %429 = vmatpush1.bf16.msra.mxu0 %v400
      %430 = vmatprep.subr.bf16.mxu0 %v404
      %431 = vmatpush1.bf16.msra.mxu0 %v403
      %432 = vmatprep.subr.bf16.mxu0 %v407
      %433 = vmatpush1.bf16.msra.mxu0 %v406
      %434 = vmatprep.subr.bf16.mxu0 %v410
      %435 = vmatpush1.bf16.msra.mxu0 %v409
      %436 = vmatprep.subr.bf16.mxu0 0
      %437 = vmatpush1.bf16.msra.mxu0 0
      %438 = vmatprep.subr.bf16.mxu0 0
      %439 = vmatpush1.bf16.msra.mxu0 0
      %440 = vmatprep.subr.bf16.mxu0 0
      %441 = vmatpush1.bf16.msra.mxu0 0
      %442 = vmatprep.subr.bf16.mxu0 0
      %443 = vmatpush1.bf16.msra.mxu0 0
      %444 = vmatprep.subr.bf16.mxu0 0
      %445 = vmatpush1.bf16.msra.mxu0 0
      %446 = vmatprep.subr.bf16.mxu0 0
      %447 = vmatpush1.bf16.msra.mxu0 0
      %448 = vmatprep.subr.bf16.mxu0 0
      %449 = vmatpush1.bf16.msra.mxu0 0
      %450 = vmatprep.subr.bf16.mxu0 0
      %451 = vmatpush1.bf16.msra.mxu0 0
      %452 = vmatprep.subr.bf16.mxu0 0
      %453 = vmatpush1.bf16.msra.mxu0 0
      %454 = vmatprep.subr.bf16.mxu0 0
      %455 = vmatpush1.bf16.msra.mxu0 0
      %456 = vmatprep.subr.bf16.mxu0 0
      %457 = vmatpush1.bf16.msra.mxu0 0
      %458 = vmatprep.subr.bf16.mxu0 0
      %459 = vmatpush1.bf16.msra.mxu0 0
      %460 = vmatprep.mubr.bf16.mxu0 0
      %461 = vmatmul.mubr.bf16.gmra.mrb[0].mxu0 %v426
      %v462 = vpop.f32.mrb[0].mxu0
      %v463 = vadd.f32 %v343, %v462
      %v464 = vpop.f32.mrb[0].mxu0
      %v465 = vadd.f32 %v347, %v464
      %v466 = vpop.f32.mrb[0].mxu0
      %v467 = vadd.f32 %v343, %v466
      %v468 = vpop.f32.mrb[0].mxu0
      %v469 = vadd.f32 %v347, %v468
      %470 = vdwg.mxu0
      %471 = vmatprep.subr.bf16.mxu0 0
      %472 = vmatpush1.bf16.msra.mxu0 %v402
      %473 = vmatprep.subr.bf16.mxu0 0
      %474 = vmatpush1.bf16.msra.mxu0 %v405
      %475 = vmatprep.subr.bf16.mxu0 0
      %476 = vmatpush1.bf16.msra.mxu0 %v408
      %477 = vmatprep.subr.bf16.mxu0 0
      %478 = vmatpush1.bf16.msra.mxu0 %v411
      %479 = vmatprep.subr.bf16.mxu0 0
      %480 = vmatpush1.bf16.msra.mxu0 0
      %481 = vmatprep.subr.bf16.mxu0 0
      %482 = vmatpush1.bf16.msra.mxu0 0
      %483 = vmatprep.subr.bf16.mxu0 0
      %484 = vmatpush1.bf16.msra.mxu0 0
      %485 = vmatprep.subr.bf16.mxu0 0
      %486 = vmatpush1.bf16.msra.mxu0 0
      %487 = vmatprep.subr.bf16.mxu0 0
      %488 = vmatpush1.bf16.msra.mxu0 0
      %489 = vmatprep.subr.bf16.mxu0 0
      %490 = vmatpush1.bf16.msra.mxu0 0
      %491 = vmatprep.subr.bf16.mxu0 0
      %492 = vmatpush1.bf16.msra.mxu0 0
      %493 = vmatprep.subr.bf16.mxu0 0
      %494 = vmatpush1.bf16.msra.mxu0 0
      %495 = vmatprep.subr.bf16.mxu0 0
      %496 = vmatpush1.bf16.msra.mxu0 0
      %497 = vmatprep.subr.bf16.mxu0 0
      %498 = vmatpush1.bf16.msra.mxu0 0
      %499 = vmatprep.subr.bf16.mxu0 0
      %500 = vmatpush1.bf16.msra.mxu0 0
      %501 = vmatprep.subr.bf16.mxu0 0
      %502 = vmatpush1.bf16.msra.mxu0 0
      %503 = vmatprep.mubr.bf16.mxu0 0
      %504 = vmatmul.mubr.bf16.gmra.mrb[0].mxu0 %v426
      %v505 = vpop.f32.mrb[0].mxu0
      %v506 = vadd.f32 %v351, %v505
      %v507 = vpop.f32.mrb[0].mxu0
      %v508 = vpop.f32.mrb[0].mxu0
      %v509 = vadd.f32 %v351, %v508
      %v510 = vpop.f32.mrb[0].mxu0
      %511 = vdwg.mxu0
      %v512 = vmax.f32 %v463, 0.0
      %v513 = vmax.f32 %v465, 0.0
      %v514 = vmax.f32 %v506, 0.0
      %v515 = vmax.f32 %v467, 0.0
      %v516 = vmax.f32 %v469, 0.0
      %v517 = vmax.f32 %v509, 0.0
      %v518 = vpack.c.bf16 %v515, %v512
      %v519 = vpack.c.bf16 %v516, %v513
      %v520 = vpack.c.bf16 %v517, %v514
      %v522 = vshrl.u32 %v518, 16
      %v524 = vrot.slane %v522, 7
      %v525 = vshll.u32 %v518, 16
      %v527 = vor.u32 %v524, %v525
      %v529 = vshrl.u32 %v519, 16
      %v531 = vrot.slane %v529, 7
      %v532 = vshll.u32 %v519, 16
      %v534 = vor.u32 %v531, %v532
      %v536 = vshrl.u32 %v520, 16
      %v538 = vrot.slane %v536, 7
      %v539 = vshll.u32 %v520, 16
      %v541 = vor.u32 %v538, %v539
      %vm545 = vcmask 1040384
      %vm546 = vsmask.f32 256
      %vm547 = vmand %vm545, %vm546
      %v548 = vsel %vm547, 0, %v527
      %v549 = vsel %vm547, 0, %v534
      %v550 = vsel %vm547, 0, %v541
      %v551 = vld [vmem:[%s3] sm:$0xff]
      %v552 = vld [vmem:[%s3 + $0x8] sm:$0xf]
      %v553 = vld [vmem:[%s3 + $0xc] sm:$0xff]
      %v554 = vld [vmem:[%s3 + $0x14] sm:$0xf]
      %v555 = vld [vmem:[%s3 + $0x18] sm:$0xff]
      %v556 = vld [vmem:[%s3 + $0x20] sm:$0xf]
      %v557 = vld [vmem:[%s3 + $0x24] sm:$0xff]
      %v558 = vld [vmem:[%s3 + $0x2c] sm:$0xf]
      %v559 = vld [vmem:[%s3 + $0x30] sm:$0xff]
      %v560 = vld [vmem:[%s3 + $0x38] sm:$0xf]
      %v561 = vld [vmem:[%s3 + $0x3c] sm:$0xff]
      %v562 = vld [vmem:[%s3 + $0x44] sm:$0xf]
      %v563 = vld [vmem:[%s3 + $0x48] sm:$0xff]
      %v564 = vld [vmem:[%s3 + $0x50] sm:$0xf]
      %v565 = vld [vmem:[%s3 + $0x54] sm:$0xff]
      %v566 = vld [vmem:[%s3 + $0x5c] sm:$0xf]
      %v567 = vld [vmem:[%s3 + $0x60] sm:$0xff]
      %v568 = vld [vmem:[%s3 + $0x68] sm:$0xf]
      %v569 = vld [vmem:[%s3 + $0x6c] sm:$0xff]
      %v570 = vld [vmem:[%s3 + $0x74] sm:$0xf]
      %v571 = vld [vmem:[%s3 + $0x78] sm:$0xff]
      %v572 = vld [vmem:[%s3 + $0x80] sm:$0xf]
      %v573 = vld [vmem:[%s3 + $0x84] sm:$0xff]
      %v574 = vld [vmem:[%s3 + $0x8c] sm:$0xf]
      %v575 = vld [vmem:[%s3 + $0x90] sm:$0xff]
      %v576 = vld [vmem:[%s3 + $0x98] sm:$0xf]
      %v577 = vld [vmem:[%s3 + $0x9c] sm:$0xff]
      %v578 = vld [vmem:[%s3 + $0xa4] sm:$0xf]
      %v579 = vld [vmem:[%s3 + $0xa8] sm:$0xff]
      %v580 = vld [vmem:[%s3 + $0xb0] sm:$0xf]
      %v581 = vld [vmem:[%s3 + $0xb4] sm:$0xff]
      %v582 = vld [vmem:[%s3 + $0xbc] sm:$0xf]
      %v583 = vld [vmem:[%s3 + $0xc0] sm:$0xff]
      %v584 = vld [vmem:[%s3 + $0xc8] sm:$0xf]
      %v585 = vld [vmem:[%s3 + $0xcc] sm:$0xff]
      %v586 = vld [vmem:[%s3 + $0xd4] sm:$0xf]
      %v587 = vld [vmem:[%s3 + $0xd8] sm:$0xff]
      %v588 = vld [vmem:[%s3 + $0xe0] sm:$0xf]
      %v589 = vld [vmem:[%s3 + $0xe4] sm:$0xff]
      %v590 = vld [vmem:[%s3 + $0xec] sm:$0xf]
      %v591 = vld [vmem:[%s3 + $0xf0] sm:$0xff]
      %v592 = vld [vmem:[%s3 + $0xf8] sm:$0xf]
      %v593 = vld [vmem:[%s3 + $0xfc] sm:$0xff]
      %v594 = vld [vmem:[%s3 + $0x104] sm:$0xf]
      %v595 = vld [vmem:[%s3 + $0x108] sm:$0xff]
      %v596 = vld [vmem:[%s3 + $0x110] sm:$0xf]
      %v597 = vld [vmem:[%s3 + $0x114] sm:$0xff]
      %v598 = vld [vmem:[%s3 + $0x11c] sm:$0xf]
      %v599 = vld [vmem:[%s3 + $0x120] sm:$0xff]
      %v600 = vld [vmem:[%s3 + $0x128] sm:$0xf]
      %v601 = vld [vmem:[%s3 + $0x12c] sm:$0xff]
      %v602 = vld [vmem:[%s3 + $0x134] sm:$0xf]
      %v603 = vld [vmem:[%s3 + $0x138] sm:$0xff]
      %v604 = vld [vmem:[%s3 + $0x140] sm:$0xf]
      %v605 = vld [vmem:[%s3 + $0x144] sm:$0xff]
      %v606 = vld [vmem:[%s3 + $0x14c] sm:$0xf]
      %v607 = vld [vmem:[%s3 + $0x150] sm:$0xff]
      %v608 = vld [vmem:[%s3 + $0x158] sm:$0xf]
      %v609 = vld [vmem:[%s3 + $0x15c] sm:$0xff]
      %v610 = vld [vmem:[%s3 + $0x164] sm:$0xf]
      %v611 = vld [vmem:[%s3 + $0x168] sm:$0xff]
      %v612 = vld [vmem:[%s3 + $0x170] sm:$0xf]
      %v613 = vld [vmem:[%s3 + $0x174] sm:$0xff]
      %v614 = vld [vmem:[%s3 + $0x17c] sm:$0xf]
      %v615 = vld [vmem:[%s3 + $0x180] sm:$0xff]
      %v616 = vld [vmem:[%s3 + $0x188] sm:$0xf]
      %v617 = vld [vmem:[%s3 + $0x18c] sm:$0xff]
      %v618 = vld [vmem:[%s3 + $0x194] sm:$0xf]
      %v619 = vld [vmem:[%s3 + $0x198] sm:$0xff]
      %v620 = vld [vmem:[%s3 + $0x1a0] sm:$0xf]
      %v621 = vld [vmem:[%s3 + $0x1a4] sm:$0xff]
      %v622 = vld [vmem:[%s3 + $0x1ac] sm:$0xf]
      %s623 = scalar_lea.vmem %s3, 432
      %v624 = vld [vmem:[%s623] sm:$0xff]
      %v625 = vld [vmem:[%s623 + $0x8] sm:$0xf]
      %v626 = vld [vmem:[%s623 + $0xc] sm:$0xff]
      %v627 = vld [vmem:[%s623 + $0x14] sm:$0xf]
      %v628 = vld [vmem:[%s623 + $0x18] sm:$0xff]
      %v629 = vld [vmem:[%s623 + $0x20] sm:$0xf]
      %v630 = vld [vmem:[%s623 + $0x24] sm:$0xff]
      %v631 = vld [vmem:[%s623 + $0x2c] sm:$0xf]
      %v632 = vld [vmem:[%s623 + $0x30] sm:$0xff]
      %v633 = vld [vmem:[%s623 + $0x38] sm:$0xf]
      %v634 = vld [vmem:[%s623 + $0x3c] sm:$0xff]
      %v635 = vld [vmem:[%s623 + $0x44] sm:$0xf]
      %v636 = vld [vmem:[%s623 + $0x48] sm:$0xff]
      %v637 = vld [vmem:[%s623 + $0x50] sm:$0xf]
      %v638 = vld [vmem:[%s623 + $0x54] sm:$0xff]
      %v639 = vld [vmem:[%s623 + $0x5c] sm:$0xf]
      %v640 = vld [vmem:[%s623 + $0x60] sm:$0xff]
      %v641 = vld [vmem:[%s623 + $0x68] sm:$0xf]
      %v642 = vld [vmem:[%s623 + $0x6c] sm:$0xff]
      %v643 = vld [vmem:[%s623 + $0x74] sm:$0xf]
      %v644 = vld [vmem:[%s623 + $0x78] sm:$0xff]
      %v645 = vld [vmem:[%s623 + $0x80] sm:$0xf]
      %v646 = vld [vmem:[%s623 + $0x84] sm:$0xff]
      %v647 = vld [vmem:[%s623 + $0x8c] sm:$0xf]
      %v648 = vld [vmem:[%s623 + $0x90] sm:$0xff]
      %v649 = vld [vmem:[%s623 + $0x98] sm:$0xf]
      %v650 = vld [vmem:[%s623 + $0x9c] sm:$0xff]
      %v651 = vld [vmem:[%s623 + $0xa4] sm:$0xf]
      %v652 = vld [vmem:[%s623 + $0xa8] sm:$0xff]
      %v653 = vld [vmem:[%s623 + $0xb0] sm:$0xf]
      %v654 = vld [vmem:[%s623 + $0xb4] sm:$0xff]
      %v655 = vld [vmem:[%s623 + $0xbc] sm:$0xf]
      %v656 = vld [vmem:[%s623 + $0xc0] sm:$0xff]
      %v657 = vld [vmem:[%s623 + $0xc8] sm:$0xf]
      %v658 = vld [vmem:[%s623 + $0xcc] sm:$0xff]
      %v659 = vld [vmem:[%s623 + $0xd4] sm:$0xf]
      %v660 = vld [vmem:[%s623 + $0xd8] sm:$0xff]
      %v661 = vld [vmem:[%s623 + $0xe0] sm:$0xf]
      %v662 = vld [vmem:[%s623 + $0xe4] sm:$0xff]
      %v663 = vld [vmem:[%s623 + $0xec] sm:$0xf]
      %v664 = vld [vmem:[%s623 + $0xf0] sm:$0xff]
      %v665 = vld [vmem:[%s623 + $0xf8] sm:$0xf]
      %v666 = vld [vmem:[%s623 + $0xfc] sm:$0xff]
      %v667 = vld [vmem:[%s623 + $0x104] sm:$0xf]
      %v668 = vld [vmem:[%s623 + $0x108] sm:$0xff]
      %v669 = vld [vmem:[%s623 + $0x110] sm:$0xf]
      %v670 = vld [vmem:[%s623 + $0x114] sm:$0xff]
      %v671 = vld [vmem:[%s623 + $0x11c] sm:$0xf]
      %v672 = vld [vmem:[%s623 + $0x120] sm:$0xff]
      %v673 = vld [vmem:[%s623 + $0x128] sm:$0xf]
      %v674 = vld [vmem:[%s623 + $0x12c] sm:$0xff]
      %v675 = vld [vmem:[%s623 + $0x134] sm:$0xf]
      %v676 = vld [vmem:[%s623 + $0x138] sm:$0xff]
      %v677 = vld [vmem:[%s623 + $0x140] sm:$0xf]
      %v678 = vld [vmem:[%s623 + $0x144] sm:$0xff]
      %v679 = vld [vmem:[%s623 + $0x14c] sm:$0xf]
      %v680 = vld [vmem:[%s623 + $0x150] sm:$0xff]
      %v681 = vld [vmem:[%s623 + $0x158] sm:$0xf]
      %v682 = vld [vmem:[%s623 + $0x15c] sm:$0xff]
      %v683 = vld [vmem:[%s623 + $0x164] sm:$0xf]
      %v684 = vld [vmem:[%s623 + $0x168] sm:$0xff]
      %v685 = vld [vmem:[%s623 + $0x170] sm:$0xf]
      %v686 = vld [vmem:[%s623 + $0x174] sm:$0xff]
      %v687 = vld [vmem:[%s623 + $0x17c] sm:$0xf]
      %v688 = vld [vmem:[%s623 + $0x180] sm:$0xff]
      %v689 = vld [vmem:[%s623 + $0x188] sm:$0xf]
      %v690 = vld [vmem:[%s623 + $0x18c] sm:$0xff]
      %v691 = vld [vmem:[%s623 + $0x194] sm:$0xf]
      %v692 = vld [vmem:[%s623 + $0x198] sm:$0xff]
      %v693 = vld [vmem:[%s623 + $0x1a0] sm:$0xf]
      %v694 = vld [vmem:[%s623 + $0x1a4] sm:$0xff]
      %v695 = vld [vmem:[%s623 + $0x1ac] sm:$0xf]
      %v768 = vunpack.c.l.b16 %v624
      %v769 = vunpack.c.h.b16 %v624
      %v770 = vunpack.c.l.b16 %v625
      %v771 = vunpack.c.l.b16 %v626
      %v772 = vunpack.c.h.b16 %v626
      %v773 = vunpack.c.l.b16 %v627
      %v774 = vunpack.c.l.b16 %v628
      %v775 = vunpack.c.h.b16 %v628
      %v776 = vunpack.c.l.b16 %v629
      %v777 = vunpack.c.l.b16 %v630
      %v778 = vunpack.c.h.b16 %v630
      %v779 = vunpack.c.l.b16 %v631
      %v780 = vunpack.c.l.b16 %v632
      %v781 = vunpack.c.h.b16 %v632
      %v782 = vunpack.c.l.b16 %v633
      %v783 = vunpack.c.l.b16 %v634
      %v784 = vunpack.c.h.b16 %v634
      %v785 = vunpack.c.l.b16 %v635
      %v786 = vunpack.c.l.b16 %v636
      %v787 = vunpack.c.h.b16 %v636
      %v788 = vunpack.c.l.b16 %v637
      %v789 = vunpack.c.l.b16 %v638
      %v790 = vunpack.c.h.b16 %v638
      %v791 = vunpack.c.l.b16 %v639
      %v792 = vunpack.c.l.b16 %v640
      %v793 = vunpack.c.h.b16 %v640
      %v794 = vunpack.c.l.b16 %v641
      %v795 = vunpack.c.l.b16 %v642
      %v796 = vunpack.c.h.b16 %v642
      %v797 = vunpack.c.l.b16 %v643
      %v798 = vunpack.c.l.b16 %v644
      %v799 = vunpack.c.h.b16 %v644
      %v800 = vunpack.c.l.b16 %v645
      %v801 = vunpack.c.l.b16 %v646
      %v802 = vunpack.c.h.b16 %v646
      %v803 = vunpack.c.l.b16 %v647
      %v804 = vunpack.c.l.b16 %v648
      %v805 = vunpack.c.h.b16 %v648
      %v806 = vunpack.c.l.b16 %v649
      %v807 = vunpack.c.l.b16 %v650
      %v808 = vunpack.c.h.b16 %v650
      %v809 = vunpack.c.l.b16 %v651
      %v810 = vunpack.c.l.b16 %v652
      %v811 = vunpack.c.h.b16 %v652
      %v812 = vunpack.c.l.b16 %v653
      %v813 = vunpack.c.l.b16 %v654
      %v814 = vunpack.c.h.b16 %v654
      %v815 = vunpack.c.l.b16 %v655
      %v816 = vunpack.c.l.b16 %v656
      %v817 = vunpack.c.h.b16 %v656
      %v818 = vunpack.c.l.b16 %v657
      %v819 = vunpack.c.l.b16 %v658
      %v820 = vunpack.c.h.b16 %v658
      %v821 = vunpack.c.l.b16 %v659
      %v822 = vunpack.c.l.b16 %v660
      %v823 = vunpack.c.h.b16 %v660
      %v824 = vunpack.c.l.b16 %v661
      %v825 = vunpack.c.l.b16 %v662
      %v826 = vunpack.c.h.b16 %v662
      %v827 = vunpack.c.l.b16 %v663
      %v828 = vunpack.c.l.b16 %v664
      %v829 = vunpack.c.h.b16 %v664
      %v830 = vunpack.c.l.b16 %v665
      %v831 = vunpack.c.l.b16 %v666
      %v832 = vunpack.c.h.b16 %v666
      %v833 = vunpack.c.l.b16 %v667
      %v834 = vunpack.c.l.b16 %v668
      %v835 = vunpack.c.h.b16 %v668
      %v836 = vunpack.c.l.b16 %v669
      %v837 = vunpack.c.l.b16 %v670
      %v838 = vunpack.c.h.b16 %v670
      %v839 = vunpack.c.l.b16 %v671
      %v840 = vunpack.c.l.b16 %v672
      %v841 = vunpack.c.h.b16 %v672
      %v842 = vunpack.c.l.b16 %v673
      %v843 = vunpack.c.l.b16 %v674
      %v844 = vunpack.c.h.b16 %v674
      %v845 = vunpack.c.l.b16 %v675
      %v846 = vunpack.c.l.b16 %v676
      %v847 = vunpack.c.h.b16 %v676
      %v848 = vunpack.c.l.b16 %v677
      %v849 = vunpack.c.l.b16 %v678
      %v850 = vunpack.c.h.b16 %v678
      %v851 = vunpack.c.l.b16 %v679
      %v852 = vunpack.c.l.b16 %v680
      %v853 = vunpack.c.h.b16 %v680
      %v854 = vunpack.c.l.b16 %v681
      %v855 = vunpack.c.l.b16 %v682
      %v856 = vunpack.c.h.b16 %v682
      %v857 = vunpack.c.l.b16 %v683
      %v858 = vunpack.c.l.b16 %v684
      %v859 = vunpack.c.h.b16 %v684
      %v860 = vunpack.c.l.b16 %v685
      %v861 = vunpack.c.l.b16 %v686
      %v862 = vunpack.c.h.b16 %v686
      %v863 = vunpack.c.l.b16 %v687
      %v864 = vunpack.c.l.b16 %v688
      %v865 = vunpack.c.h.b16 %v688
      %v866 = vunpack.c.l.b16 %v689
      %v867 = vunpack.c.l.b16 %v690
      %v868 = vunpack.c.h.b16 %v690
      %v869 = vunpack.c.l.b16 %v691
      %v870 = vunpack.c.l.b16 %v692
      %v871 = vunpack.c.h.b16 %v692
      %v872 = vunpack.c.l.b16 %v693
      %v873 = vunpack.c.l.b16 %v694
      %v874 = vunpack.c.h.b16 %v694
      %v875 = vunpack.c.l.b16 %v695
      %v876 = vpack.c.b16 %v771, %v768
      %v877 = vpack.c.b16 %v772, %v769
      %v878 = vpack.c.b16 %v773, %v770
      %v879 = vpack.c.b16 %v777, %v774
      %v880 = vpack.c.b16 %v778, %v775
      %v881 = vpack.c.b16 %v779, %v776
      %v882 = vpack.c.b16 %v783, %v780
      %v883 = vpack.c.b16 %v784, %v781
      %v884 = vpack.c.b16 %v785, %v782
      %v885 = vpack.c.b16 %v789, %v786
      %v886 = vpack.c.b16 %v790, %v787
      %v887 = vpack.c.b16 %v791, %v788
      %v888 = vpack.c.b16 %v795, %v792
      %v889 = vpack.c.b16 %v796, %v793
      %v890 = vpack.c.b16 %v797, %v794
      %v891 = vpack.c.b16 %v801, %v798
      %v892 = vpack.c.b16 %v802, %v799
      %v893 = vpack.c.b16 %v803, %v800
      %v894 = vpack.c.b16 %v807, %v804
      %v895 = vpack.c.b16 %v808, %v805
      %v896 = vpack.c.b16 %v809, %v806
      %v897 = vpack.c.b16 %v813, %v810
      %v898 = vpack.c.b16 %v814, %v811
      %v899 = vpack.c.b16 %v815, %v812
      %v900 = vpack.c.b16 %v819, %v816
      %v901 = vpack.c.b16 %v820, %v817
      %v902 = vpack.c.b16 %v821, %v818
      %v903 = vpack.c.b16 %v825, %v822
      %v904 = vpack.c.b16 %v826, %v823
      %v905 = vpack.c.b16 %v827, %v824
      %v906 = vpack.c.b16 %v831, %v828
      %v907 = vpack.c.b16 %v832, %v829
      %v908 = vpack.c.b16 %v833, %v830
      %v909 = vpack.c.b16 %v837, %v834
      %v910 = vpack.c.b16 %v838, %v835
      %v911 = vpack.c.b16 %v839, %v836
      %v912 = vpack.c.b16 %v843, %v840
      %v913 = vpack.c.b16 %v844, %v841
      %v914 = vpack.c.b16 %v845, %v842
      %v915 = vpack.c.b16 %v849, %v846
      %v916 = vpack.c.b16 %v850, %v847
      %v917 = vpack.c.b16 %v851, %v848
      %v918 = vpack.c.b16 %v855, %v852
      %v919 = vpack.c.b16 %v856, %v853
      %v920 = vpack.c.b16 %v857, %v854
      %v921 = vpack.c.b16 %v861, %v858
      %v922 = vpack.c.b16 %v862, %v859
      %v923 = vpack.c.b16 %v863, %v860
      %v924 = vpack.c.b16 %v867, %v864
      %v925 = vpack.c.b16 %v868, %v865
      %v926 = vpack.c.b16 %v869, %v866
      %v927 = vpack.c.b16 %v873, %v870
      %v928 = vpack.c.b16 %v874, %v871
      %v929 = vpack.c.b16 %v875, %v872
      %vm984 = vcmask 261120
      %v985 = vsel %vm984, %v520, 0
      %987 = vmatprep.subr.bf16.mxu0 %v877
      %988 = vmatpush1.bf16.msra.mxu0 %v876
      %989 = vmatprep.subr.bf16.mxu0 %v880
      %990 = vmatpush1.bf16.msra.mxu0 %v879
      %991 = vmatprep.subr.bf16.mxu0 %v883
      %992 = vmatpush1.bf16.msra.mxu0 %v882
      %993 = vmatprep.subr.bf16.mxu0 %v886
      %994 = vmatpush1.bf16.msra.mxu0 %v885
      %995 = vmatprep.subr.bf16.mxu0 %v889
      %996 = vmatpush1.bf16.msra.mxu0 %v888
      %997 = vmatprep.subr.bf16.mxu0 %v892
      %998 = vmatpush1.bf16.msra.mxu0 %v891
      %999 = vmatprep.subr.bf16.mxu0 %v895
      %1000 = vmatpush1.bf16.msra.mxu0 %v894
      %1001 = vmatprep.subr.bf16.mxu0 %v898
      %1002 = vmatpush1.bf16.msra.mxu0 %v897
      %1003 = vmatprep.subr.bf16.mxu0 %v901
      %1004 = vmatpush1.bf16.msra.mxu0 %v900
      %1005 = vmatprep.subr.bf16.mxu0 %v904
      %1006 = vmatpush1.bf16.msra.mxu0 %v903
      %1007 = vmatprep.subr.bf16.mxu0 %v907
      %1008 = vmatpush1.bf16.msra.mxu0 %v906
      %1009 = vmatprep.subr.bf16.mxu0 %v910
      %1010 = vmatpush1.bf16.msra.mxu0 %v909
      %1011 = vmatprep.subr.bf16.mxu0 %v913
      %1012 = vmatpush1.bf16.msra.mxu0 %v912
      %1013 = vmatprep.subr.bf16.mxu0 %v916
      %1014 = vmatpush1.bf16.msra.mxu0 %v915
      %1015 = vmatprep.subr.bf16.mxu0 %v919
      %1016 = vmatpush1.bf16.msra.mxu0 %v918
      %1017 = vmatprep.subr.bf16.mxu0 %v922
      %1018 = vmatpush1.bf16.msra.mxu0 %v921
      %1019 = vmatprep.mubr.bf16.mxu0 %v519
      %1020 = vmatmul.mubr.bf16.gmra.mrb[0].mxu0 %v518
      %v1021 = vpop.f32.mrb[0].mxu0
      %v1022 = vadd.f32 0.0, %v1021
      %v1023 = vpop.f32.mrb[0].mxu0
      %v1024 = vadd.f32 0.0, %v1023
      %v1025 = vpop.f32.mrb[0].mxu0
      %v1026 = vadd.f32 0.0, %v1025
      %v1027 = vpop.f32.mrb[0].mxu0
      %v1028 = vadd.f32 0.0, %v1027
      %1029 = vdwg.mxu0
      %1030 = vmatprep.subr.bf16.mxu0 %v925
      %1031 = vmatpush1.bf16.msra.mxu0 %v924
      %1032 = vmatprep.subr.bf16.mxu0 %v928
      %1033 = vmatpush1.bf16.msra.mxu0 %v927
      %1034 = vmatprep.subr.bf16.mxu0 0
      %1035 = vmatpush1.bf16.msra.mxu0 0
      %1036 = vmatprep.subr.bf16.mxu0 0
      %1037 = vmatpush1.bf16.msra.mxu0 0
      %1038 = vmatprep.subr.bf16.mxu0 0
      %1039 = vmatpush1.bf16.msra.mxu0 0
      %1040 = vmatprep.subr.bf16.mxu0 0
      %1041 = vmatpush1.bf16.msra.mxu0 0
      %1042 = vmatprep.subr.bf16.mxu0 0
      %1043 = vmatpush1.bf16.msra.mxu0 0
      %1044 = vmatprep.subr.bf16.mxu0 0
      %1045 = vmatpush1.bf16.msra.mxu0 0
      %1046 = vmatprep.subr.bf16.mxu0 0
      %1047 = vmatpush1.bf16.msra.mxu0 0
      %1048 = vmatprep.subr.bf16.mxu0 0
      %1049 = vmatpush1.bf16.msra.mxu0 0
      %1050 = vmatprep.subr.bf16.mxu0 0
      %1051 = vmatpush1.bf16.msra.mxu0 0
      %1052 = vmatprep.subr.bf16.mxu0 0
      %1053 = vmatpush1.bf16.msra.mxu0 0
      %1054 = vmatprep.subr.bf16.mxu0 0
      %1055 = vmatpush1.bf16.msra.mxu0 0
      %1056 = vmatprep.subr.bf16.mxu0 0
      %1057 = vmatpush1.bf16.msra.mxu0 0
      %1058 = vmatprep.subr.bf16.mxu0 0
      %1059 = vmatpush1.bf16.msra.mxu0 0
      %1060 = vmatprep.subr.bf16.mxu0 0
      %1061 = vmatpush1.bf16.msra.mxu0 0
      %1062 = vmatprep.mubr.bf16.mxu0 0
      %1063 = vmatmul.mubr.bf16.gmra.mrb[0].mxu0 %v985
      %v1064 = vpop.f32.mrb[0].mxu0
      %v1065 = vadd.f32 %v1022, %v1064
      %v1066 = vpop.f32.mrb[0].mxu0
      %v1067 = vadd.f32 %v1024, %v1066
      %v1068 = vpop.f32.mrb[0].mxu0
      %v1069 = vadd.f32 %v1026, %v1068
      %v1070 = vpop.f32.mrb[0].mxu0
      %v1071 = vadd.f32 %v1028, %v1070
      %1072 = vdwg.mxu0
      %1073 = vmatprep.subr.bf16.mxu0 0
      %1074 = vmatpush1.bf16.msra.mxu0 %v878
      %1075 = vmatprep.subr.bf16.mxu0 0
      %1076 = vmatpush1.bf16.msra.mxu0 %v881
      %1077 = vmatprep.subr.bf16.mxu0 0
      %1078 = vmatpush1.bf16.msra.mxu0 %v884
      %1079 = vmatprep.subr.bf16.mxu0 0
      %1080 = vmatpush1.bf16.msra.mxu0 %v887
      %1081 = vmatprep.subr.bf16.mxu0 0
      %1082 = vmatpush1.bf16.msra.mxu0 %v890
      %1083 = vmatprep.subr.bf16.mxu0 0
      %1084 = vmatpush1.bf16.msra.mxu0 %v893
      %1085 = vmatprep.subr.bf16.mxu0 0
      %1086 = vmatpush1.bf16.msra.mxu0 %v896
      %1087 = vmatprep.subr.bf16.mxu0 0
      %1088 = vmatpush1.bf16.msra.mxu0 %v899
      %1089 = vmatprep.subr.bf16.mxu0 0
      %1090 = vmatpush1.bf16.msra.mxu0 %v902
      %1091 = vmatprep.subr.bf16.mxu0 0
      %1092 = vmatpush1.bf16.msra.mxu0 %v905
      %1093 = vmatprep.subr.bf16.mxu0 0
      %1094 = vmatpush1.bf16.msra.mxu0 %v908
      %1095 = vmatprep.subr.bf16.mxu0 0
      %1096 = vmatpush1.bf16.msra.mxu0 %v911
      %1097 = vmatprep.subr.bf16.mxu0 0
      %1098 = vmatpush1.bf16.msra.mxu0 %v914
      %1099 = vmatprep.subr.bf16.mxu0 0
      %1100 = vmatpush1.bf16.msra.mxu0 %v917
      %1101 = vmatprep.subr.bf16.mxu0 0
      %1102 = vmatpush1.bf16.msra.mxu0 %v920
      %1103 = vmatprep.subr.bf16.mxu0 0
      %1104 = vmatpush1.bf16.msra.mxu0 %v923
      %1105 = vmatprep.mubr.bf16.mxu0 %v519
      %1106 = vmatmul.mubr.bf16.gmra.mrb[0].mxu0 %v518
      %v1107 = vpop.f32.mrb[0].mxu0
      %v1108 = vadd.f32 0.0, %v1107
      %v1109 = vpop.f32.mrb[0].mxu0
      %v1110 = vpop.f32.mrb[0].mxu0
      %v1111 = vadd.f32 0.0, %v1110
      %v1112 = vpop.f32.mrb[0].mxu0
      %1113 = vdwg.mxu0
      %1114 = vmatprep.subr.bf16.mxu0 0
      %1115 = vmatpush1.bf16.msra.mxu0 %v926
      %1116 = vmatprep.subr.bf16.mxu0 0
      %1117 = vmatpush1.bf16.msra.mxu0 %v929
      %1118 = vmatprep.subr.bf16.mxu0 0
      %1119 = vmatpush1.bf16.msra.mxu0 0
      %1120 = vmatprep.subr.bf16.mxu0 0
      %1121 = vmatpush1.bf16.msra.mxu0 0
      %1122 = vmatprep.subr.bf16.mxu0 0
      %1123 = vmatpush1.bf16.msra.mxu0 0
      %1124 = vmatprep.subr.bf16.mxu0 0
      %1125 = vmatpush1.bf16.msra.mxu0 0
      %1126 = vmatprep.subr.bf16.mxu0 0
      %1127 = vmatpush1.bf16.msra.mxu0 0
      %1128 = vmatprep.subr.bf16.mxu0 0
      %1129 = vmatpush1.bf16.msra.mxu0 0
      %1130 = vmatprep.subr.bf16.mxu0 0
      %1131 = vmatpush1.bf16.msra.mxu0 0
      %1132 = vmatprep.subr.bf16.mxu0 0
      %1133 = vmatpush1.bf16.msra.mxu0 0
      %1134 = vmatprep.subr.bf16.mxu0 0
      %1135 = vmatpush1.bf16.msra.mxu0 0
      %1136 = vmatprep.subr.bf16.mxu0 0
      %1137 = vmatpush1.bf16.msra.mxu0 0
      %1138 = vmatprep.subr.bf16.mxu0 0
      %1139 = vmatpush1.bf16.msra.mxu0 0
      %1140 = vmatprep.subr.bf16.mxu0 0
      %1141 = vmatpush1.bf16.msra.mxu0 0
      %1142 = vmatprep.subr.bf16.mxu0 0
      %1143 = vmatpush1.bf16.msra.mxu0 0
      %1144 = vmatprep.subr.bf16.mxu0 0
      %1145 = vmatpush1.bf16.msra.mxu0 0
      %1146 = vmatprep.mubr.bf16.mxu0 0
      %1147 = vmatmul.mubr.bf16.gmra.mrb[0].mxu0 %v985
      %v1148 = vpop.f32.mrb[0].mxu0
      %v1149 = vadd.f32 %v1108, %v1148
      %v1150 = vpop.f32.mrb[0].mxu0
      %v1151 = vpop.f32.mrb[0].mxu0
      %v1152 = vadd.f32 %v1111, %v1151
      %v1153 = vpop.f32.mrb[0].mxu0
      %1154 = vdwg.mxu0
      %v1227 = vunpack.c.l.b16 %v551
      %v1228 = vunpack.c.h.b16 %v551
      %v1229 = vunpack.c.l.b16 %v552
      %v1230 = vunpack.c.l.b16 %v553
      %v1231 = vunpack.c.h.b16 %v553
      %v1232 = vunpack.c.l.b16 %v554
      %v1233 = vunpack.c.l.b16 %v555
      %v1234 = vunpack.c.h.b16 %v555
      %v1235 = vunpack.c.l.b16 %v556
      %v1236 = vunpack.c.l.b16 %v557
      %v1237 = vunpack.c.h.b16 %v557
      %v1238 = vunpack.c.l.b16 %v558
      %v1239 = vunpack.c.l.b16 %v559
      %v1240 = vunpack.c.h.b16 %v559
      %v1241 = vunpack.c.l.b16 %v560
      %v1242 = vunpack.c.l.b16 %v561
      %v1243 = vunpack.c.h.b16 %v561
      %v1244 = vunpack.c.l.b16 %v562
      %v1245 = vunpack.c.l.b16 %v563
      %v1246 = vunpack.c.h.b16 %v563
      %v1247 = vunpack.c.l.b16 %v564
      %v1248 = vunpack.c.l.b16 %v565
      %v1249 = vunpack.c.h.b16 %v565
      %v1250 = vunpack.c.l.b16 %v566
      %v1251 = vunpack.c.l.b16 %v567
      %v1252 = vunpack.c.h.b16 %v567
      %v1253 = vunpack.c.l.b16 %v568
      %v1254 = vunpack.c.l.b16 %v569
      %v1255 = vunpack.c.h.b16 %v569
      %v1256 = vunpack.c.l.b16 %v570
      %v1257 = vunpack.c.l.b16 %v571
      %v1258 = vunpack.c.h.b16 %v571
      %v1259 = vunpack.c.l.b16 %v572
      %v1260 = vunpack.c.l.b16 %v573
      %v1261 = vunpack.c.h.b16 %v573
      %v1262 = vunpack.c.l.b16 %v574
      %v1263 = vunpack.c.l.b16 %v575
      %v1264 = vunpack.c.h.b16 %v575
      %v1265 = vunpack.c.l.b16 %v576
      %v1266 = vunpack.c.l.b16 %v577
      %v1267 = vunpack.c.h.b16 %v577
      %v1268 = vunpack.c.l.b16 %v578
      %v1269 = vunpack.c.l.b16 %v579
      %v1270 = vunpack.c.h.b16 %v579
      %v1271 = vunpack.c.l.b16 %v580
      %v1272 = vunpack.c.l.b16 %v581
      %v1273 = vunpack.c.h.b16 %v581
      %v1274 = vunpack.c.l.b16 %v582
      %v1275 = vunpack.c.l.b16 %v583
      %v1276 = vunpack.c.h.b16 %v583
      %v1277 = vunpack.c.l.b16 %v584
      %v1278 = vunpack.c.l.b16 %v585
      %v1279 = vunpack.c.h.b16 %v585
      %v1280 = vunpack.c.l.b16 %v586
      %v1281 = vunpack.c.l.b16 %v587
      %v1282 = vunpack.c.h.b16 %v587
      %v1283 = vunpack.c.l.b16 %v588
      %v1284 = vunpack.c.l.b16 %v589
      %v1285 = vunpack.c.h.b16 %v589
      %v1286 = vunpack.c.l.b16 %v590
      %v1287 = vunpack.c.l.b16 %v591
      %v1288 = vunpack.c.h.b16 %v591
      %v1289 = vunpack.c.l.b16 %v592
      %v1290 = vunpack.c.l.b16 %v593
      %v1291 = vunpack.c.h.b16 %v593
      %v1292 = vunpack.c.l.b16 %v594
      %v1293 = vunpack.c.l.b16 %v595
      %v1294 = vunpack.c.h.b16 %v595
      %v1295 = vunpack.c.l.b16 %v596
      %v1296 = vunpack.c.l.b16 %v597
      %v1297 = vunpack.c.h.b16 %v597
      %v1298 = vunpack.c.l.b16 %v598
      %v1299 = vunpack.c.l.b16 %v599
      %v1300 = vunpack.c.h.b16 %v599
      %v1301 = vunpack.c.l.b16 %v600
      %v1302 = vunpack.c.l.b16 %v601
      %v1303 = vunpack.c.h.b16 %v601
      %v1304 = vunpack.c.l.b16 %v602
      %v1305 = vunpack.c.l.b16 %v603
      %v1306 = vunpack.c.h.b16 %v603
      %v1307 = vunpack.c.l.b16 %v604
      %v1308 = vunpack.c.l.b16 %v605
      %v1309 = vunpack.c.h.b16 %v605
      %v1310 = vunpack.c.l.b16 %v606
      %v1311 = vunpack.c.l.b16 %v607
      %v1312 = vunpack.c.h.b16 %v607
      %v1313 = vunpack.c.l.b16 %v608
      %v1314 = vunpack.c.l.b16 %v609
      %v1315 = vunpack.c.h.b16 %v609
      %v1316 = vunpack.c.l.b16 %v610
      %v1317 = vunpack.c.l.b16 %v611
      %v1318 = vunpack.c.h.b16 %v611
      %v1319 = vunpack.c.l.b16 %v612
      %v1320 = vunpack.c.l.b16 %v613
      %v1321 = vunpack.c.h.b16 %v613
      %v1322 = vunpack.c.l.b16 %v614
      %v1323 = vunpack.c.l.b16 %v615
      %v1324 = vunpack.c.h.b16 %v615
      %v1325 = vunpack.c.l.b16 %v616
      %v1326 = vunpack.c.l.b16 %v617
      %v1327 = vunpack.c.h.b16 %v617
      %v1328 = vunpack.c.l.b16 %v618
      %v1329 = vunpack.c.l.b16 %v619
      %v1330 = vunpack.c.h.b16 %v619
      %v1331 = vunpack.c.l.b16 %v620
      %v1332 = vunpack.c.l.b16 %v621
      %v1333 = vunpack.c.h.b16 %v621
      %v1334 = vunpack.c.l.b16 %v622
      %v1335 = vpack.c.b16 %v1230, %v1227
      %v1336 = vpack.c.b16 %v1231, %v1228
      %v1337 = vpack.c.b16 %v1232, %v1229
      %v1338 = vpack.c.b16 %v1236, %v1233
      %v1339 = vpack.c.b16 %v1237, %v1234
      %v1340 = vpack.c.b16 %v1238, %v1235
      %v1341 = vpack.c.b16 %v1242, %v1239
      %v1342 = vpack.c.b16 %v1243, %v1240
      %v1343 = vpack.c.b16 %v1244, %v1241
      %v1344 = vpack.c.b16 %v1248, %v1245
      %v1345 = vpack.c.b16 %v1249, %v1246
      %v1346 = vpack.c.b16 %v1250, %v1247
      %v1347 = vpack.c.b16 %v1254, %v1251
      %v1348 = vpack.c.b16 %v1255, %v1252
      %v1349 = vpack.c.b16 %v1256, %v1253
      %v1350 = vpack.c.b16 %v1260, %v1257
      %v1351 = vpack.c.b16 %v1261, %v1258
      %v1352 = vpack.c.b16 %v1262, %v1259
      %v1353 = vpack.c.b16 %v1266, %v1263
      %v1354 = vpack.c.b16 %v1267, %v1264
      %v1355 = vpack.c.b16 %v1268, %v1265
      %v1356 = vpack.c.b16 %v1272, %v1269
      %v1357 = vpack.c.b16 %v1273, %v1270
      %v1358 = vpack.c.b16 %v1274, %v1271
      %v1359 = vpack.c.b16 %v1278, %v1275
      %v1360 = vpack.c.b16 %v1279, %v1276
      %v1361 = vpack.c.b16 %v1280, %v1277
      %v1362 = vpack.c.b16 %v1284, %v1281
      %v1363 = vpack.c.b16 %v1285, %v1282
      %v1364 = vpack.c.b16 %v1286, %v1283
      %v1365 = vpack.c.b16 %v1290, %v1287
      %v1366 = vpack.c.b16 %v1291, %v1288
      %v1367 = vpack.c.b16 %v1292, %v1289
      %v1368 = vpack.c.b16 %v1296, %v1293
      %v1369 = vpack.c.b16 %v1297, %v1294
      %v1370 = vpack.c.b16 %v1298, %v1295
      %v1371 = vpack.c.b16 %v1302, %v1299
      %v1372 = vpack.c.b16 %v1303, %v1300
      %v1373 = vpack.c.b16 %v1304, %v1301
      %v1374 = vpack.c.b16 %v1308, %v1305
      %v1375 = vpack.c.b16 %v1309, %v1306
      %v1376 = vpack.c.b16 %v1310, %v1307
      %v1377 = vpack.c.b16 %v1314, %v1311
      %v1378 = vpack.c.b16 %v1315, %v1312
      %v1379 = vpack.c.b16 %v1316, %v1313
      %v1380 = vpack.c.b16 %v1320, %v1317
      %v1381 = vpack.c.b16 %v1321, %v1318
      %v1382 = vpack.c.b16 %v1322, %v1319
      %v1383 = vpack.c.b16 %v1326, %v1323
      %v1384 = vpack.c.b16 %v1327, %v1324
      %v1385 = vpack.c.b16 %v1328, %v1325
      %v1386 = vpack.c.b16 %v1332, %v1329
      %v1387 = vpack.c.b16 %v1333, %v1330
      %v1388 = vpack.c.b16 %v1334, %v1331
      %v1444 = vsel %vm984, %v550, 0
      %1446 = vmatprep.subr.bf16.mxu0 %v1336
      %1447 = vmatpush1.bf16.msra.mxu0 %v1335
      %1448 = vmatprep.subr.bf16.mxu0 %v1339
      %1449 = vmatpush1.bf16.msra.mxu0 %v1338
      %1450 = vmatprep.subr.bf16.mxu0 %v1342
      %1451 = vmatpush1.bf16.msra.mxu0 %v1341
      %1452 = vmatprep.subr.bf16.mxu0 %v1345
      %1453 = vmatpush1.bf16.msra.mxu0 %v1344
      %1454 = vmatprep.subr.bf16.mxu0 %v1348
      %1455 = vmatpush1.bf16.msra.mxu0 %v1347
      %1456 = vmatprep.subr.bf16.mxu0 %v1351
      %1457 = vmatpush1.bf16.msra.mxu0 %v1350
      %1458 = vmatprep.subr.bf16.mxu0 %v1354
      %1459 = vmatpush1.bf16.msra.mxu0 %v1353
      %1460 = vmatprep.subr.bf16.mxu0 %v1357
      %1461 = vmatpush1.bf16.msra.mxu0 %v1356
      %1462 = vmatprep.subr.bf16.mxu0 %v1360
      %1463 = vmatpush1.bf16.msra.mxu0 %v1359
      %1464 = vmatprep.subr.bf16.mxu0 %v1363
      %1465 = vmatpush1.bf16.msra.mxu0 %v1362
      %1466 = vmatprep.subr.bf16.mxu0 %v1366
      %1467 = vmatpush1.bf16.msra.mxu0 %v1365
      %1468 = vmatprep.subr.bf16.mxu0 %v1369
      %1469 = vmatpush1.bf16.msra.mxu0 %v1368
      %1470 = vmatprep.subr.bf16.mxu0 %v1372
      %1471 = vmatpush1.bf16.msra.mxu0 %v1371
      %1472 = vmatprep.subr.bf16.mxu0 %v1375
      %1473 = vmatpush1.bf16.msra.mxu0 %v1374
      %1474 = vmatprep.subr.bf16.mxu0 %v1378
      %1475 = vmatpush1.bf16.msra.mxu0 %v1377
      %1476 = vmatprep.subr.bf16.mxu0 %v1381
      %1477 = vmatpush1.bf16.msra.mxu0 %v1380
      %1478 = vmatprep.mubr.bf16.mxu0 %v549
      %1479 = vmatmul.mubr.bf16.gmra.mrb[0].mxu0 %v548
      %v1480 = vpop.f32.mrb[0].mxu0
      %v1481 = vadd.f32 %v1065, %v1480
      %v1482 = vpop.f32.mrb[0].mxu0
      %v1483 = vadd.f32 %v1067, %v1482
      %v1484 = vpop.f32.mrb[0].mxu0
      %v1485 = vadd.f32 %v1069, %v1484
      %v1486 = vpop.f32.mrb[0].mxu0
      %v1487 = vadd.f32 %v1071, %v1486
      %1488 = vdwg.mxu0
      %1489 = vmatprep.subr.bf16.mxu0 %v1384
      %1490 = vmatpush1.bf16.msra.mxu0 %v1383
      %1491 = vmatprep.subr.bf16.mxu0 %v1387
      %1492 = vmatpush1.bf16.msra.mxu0 %v1386
      %1493 = vmatprep.subr.bf16.mxu0 0
      %1494 = vmatpush1.bf16.msra.mxu0 0
      %1495 = vmatprep.subr.bf16.mxu0 0
      %1496 = vmatpush1.bf16.msra.mxu0 0
      %1497 = vmatprep.subr.bf16.mxu0 0
      %1498 = vmatpush1.bf16.msra.mxu0 0
      %1499 = vmatprep.subr.bf16.mxu0 0
      %1500 = vmatpush1.bf16.msra.mxu0 0
      %1501 = vmatprep.subr.bf16.mxu0 0
      %1502 = vmatpush1.bf16.msra.mxu0 0
      %1503 = vmatprep.subr.bf16.mxu0 0
      %1504 = vmatpush1.bf16.msra.mxu0 0
      %1505 = vmatprep.subr.bf16.mxu0 0
      %1506 = vmatpush1.bf16.msra.mxu0 0
      %1507 = vmatprep.subr.bf16.mxu0 0
      %1508 = vmatpush1.bf16.msra.mxu0 0
      %1509 = vmatprep.subr.bf16.mxu0 0
      %1510 = vmatpush1.bf16.msra.mxu0 0
      %1511 = vmatprep.subr.bf16.mxu0 0
      %1512 = vmatpush1.bf16.msra.mxu0 0
      %1513 = vmatprep.subr.bf16.mxu0 0
      %1514 = vmatpush1.bf16.msra.mxu0 0
      %1515 = vmatprep.subr.bf16.mxu0 0
      %1516 = vmatpush1.bf16.msra.mxu0 0
      %1517 = vmatprep.subr.bf16.mxu0 0
      %1518 = vmatpush1.bf16.msra.mxu0 0
      %1519 = vmatprep.subr.bf16.mxu0 0
      %1520 = vmatpush1.bf16.msra.mxu0 0
      %1521 = vmatprep.mubr.bf16.mxu0 0
      %1522 = vmatmul.mubr.bf16.gmra.mrb[0].mxu0 %v1444
      %v1523 = vpop.f32.mrb[0].mxu0
      %v1524 = vadd.f32 %v1481, %v1523
      %v1525 = vpop.f32.mrb[0].mxu0
      %v1526 = vadd.f32 %v1483, %v1525
      %v1527 = vpop.f32.mrb[0].mxu0
      %v1528 = vadd.f32 %v1485, %v1527
      %v1529 = vpop.f32.mrb[0].mxu0
      %v1530 = vadd.f32 %v1487, %v1529
      %1531 = vdwg.mxu0
      %1532 = vmatprep.subr.bf16.mxu0 0
      %1533 = vmatpush1.bf16.msra.mxu0 %v1337
      %1534 = vmatprep.subr.bf16.mxu0 0
      %1535 = vmatpush1.bf16.msra.mxu0 %v1340
      %1536 = vmatprep.subr.bf16.mxu0 0
      %1537 = vmatpush1.bf16.msra.mxu0 %v1343
      %1538 = vmatprep.subr.bf16.mxu0 0
      %1539 = vmatpush1.bf16.msra.mxu0 %v1346
      %1540 = vmatprep.subr.bf16.mxu0 0
      %1541 = vmatpush1.bf16.msra.mxu0 %v1349
      %1542 = vmatprep.subr.bf16.mxu0 0
      %1543 = vmatpush1.bf16.msra.mxu0 %v1352
      %1544 = vmatprep.subr.bf16.mxu0 0
      %1545 = vmatpush1.bf16.msra.mxu0 %v1355
      %1546 = vmatprep.subr.bf16.mxu0 0
      %1547 = vmatpush1.bf16.msra.mxu0 %v1358
      %1548 = vmatprep.subr.bf16.mxu0 0
      %1549 = vmatpush1.bf16.msra.mxu0 %v1361
      %1550 = vmatprep.subr.bf16.mxu0 0
      %1551 = vmatpush1.bf16.msra.mxu0 %v1364
      %1552 = vmatprep.subr.bf16.mxu0 0
      %1553 = vmatpush1.bf16.msra.mxu0 %v1367
      %1554 = vmatprep.subr.bf16.mxu0 0
      %1555 = vmatpush1.bf16.msra.mxu0 %v1370
      %1556 = vmatprep.subr.bf16.mxu0 0
      %1557 = vmatpush1.bf16.msra.mxu0 %v1373
      %1558 = vmatprep.subr.bf16.mxu0 0
      %1559 = vmatpush1.bf16.msra.mxu0 %v1376
      %1560 = vmatprep.subr.bf16.mxu0 0
      %1561 = vmatpush1.bf16.msra.mxu0 %v1379
      %1562 = vmatprep.subr.bf16.mxu0 0
      %1563 = vmatpush1.bf16.msra.mxu0 %v1382
      %1564 = vmatprep.mubr.bf16.mxu0 %v549
      %1565 = vmatmul.mubr.bf16.gmra.mrb[0].mxu0 %v548
      %v1566 = vpop.f32.mrb[0].mxu0
      %v1567 = vadd.f32 %v1149, %v1566
      %v1568 = vpop.f32.mrb[0].mxu0
      %v1569 = vpop.f32.mrb[0].mxu0
      %v1570 = vadd.f32 %v1152, %v1569
      %v1571 = vpop.f32.mrb[0].mxu0
      %1572 = vdwg.mxu0
      %1573 = vmatprep.subr.bf16.mxu0 0
      %1574 = vmatpush1.bf16.msra.mxu0 %v1385
      %1575 = vmatprep.subr.bf16.mxu0 0
      %1576 = vmatpush1.bf16.msra.mxu0 %v1388
      %1577 = vmatprep.subr.bf16.mxu0 0
      %1578 = vmatpush1.bf16.msra.mxu0 0
      %1579 = vmatprep.subr.bf16.mxu0 0
      %1580 = vmatpush1.bf16.msra.mxu0 0
      %1581 = vmatprep.subr.bf16.mxu0 0
      %1582 = vmatpush1.bf16.msra.mxu0 0
      %1583 = vmatprep.subr.bf16.mxu0 0
      %1584 = vmatpush1.bf16.msra.mxu0 0
      %1585 = vmatprep.subr.bf16.mxu0 0
      %1586 = vmatpush1.bf16.msra.mxu0 0
      %1587 = vmatprep.subr.bf16.mxu0 0
      %1588 = vmatpush1.bf16.msra.mxu0 0
      %1589 = vmatprep.subr.bf16.mxu0 0
      %1590 = vmatpush1.bf16.msra.mxu0 0
      %1591 = vmatprep.subr.bf16.mxu0 0
      %1592 = vmatpush1.bf16.msra.mxu0 0
      %1593 = vmatprep.subr.bf16.mxu0 0
      %1594 = vmatpush1.bf16.msra.mxu0 0
      %1595 = vmatprep.subr.bf16.mxu0 0
      %1596 = vmatpush1.bf16.msra.mxu0 0
      %1597 = vmatprep.subr.bf16.mxu0 0
      %1598 = vmatpush1.bf16.msra.mxu0 0
      %1599 = vmatprep.subr.bf16.mxu0 0
      %1600 = vmatpush1.bf16.msra.mxu0 0
      %1601 = vmatprep.subr.bf16.mxu0 0
      %1602 = vmatpush1.bf16.msra.mxu0 0
      %1603 = vmatprep.subr.bf16.mxu0 0
      %1604 = vmatpush1.bf16.msra.mxu0 0
      %1605 = vmatprep.mubr.bf16.mxu0 0
      %1606 = vmatmul.mubr.bf16.gmra.mrb[0].mxu0 %v1444
      %v1607 = vpop.f32.mrb[0].mxu0
      %v1608 = vadd.f32 %v1567, %v1607
      %v1609 = vpop.f32.mrb[0].mxu0
      %v1610 = vpop.f32.mrb[0].mxu0
      %v1611 = vadd.f32 %v1570, %v1610
      %v1612 = vpop.f32.mrb[0].mxu0
      %1613 = vdwg.mxu0
      %v1614 = vrot.slane %v525, 1
      %v1615 = vor.u32 %v522, %v1614
      %v1616 = vrot.slane %v532, 1
      %v1617 = vor.u32 %v529, %v1616
      %v1618 = vrot.slane %v539, 1
      %v1619 = vor.u32 %v536, %v1618
      %vm1623 = vcmask 1047552
      %vm1624 = vsmask.f32 7424
      %vm1625 = vmand %vm1623, %vm1624
      %v1626 = vsel %vm1625, %v1615, 0
      %v1627 = vsel %vm1625, %v1617, 0
      %v1628 = vsel %vm1625, %v1619, 0
      %s1629 = scalar_lea.vmem %s3, 864
      %v1630 = vld [vmem:[%s1629] sm:$0xff]
      %v1631 = vld [vmem:[%s1629 + $0x8] sm:$0xf]
      %v1632 = vld [vmem:[%s1629 + $0xc] sm:$0xff]
      %v1633 = vld [vmem:[%s1629 + $0x14] sm:$0xf]
      %v1634 = vld [vmem:[%s1629 + $0x18] sm:$0xff]
      %v1635 = vld [vmem:[%s1629 + $0x20] sm:$0xf]
      %v1636 = vld [vmem:[%s1629 + $0x24] sm:$0xff]
      %v1637 = vld [vmem:[%s1629 + $0x2c] sm:$0xf]
      %v1638 = vld [vmem:[%s1629 + $0x30] sm:$0xff]
      %v1639 = vld [vmem:[%s1629 + $0x38] sm:$0xf]
      %v1640 = vld [vmem:[%s1629 + $0x3c] sm:$0xff]
      %v1641 = vld [vmem:[%s1629 + $0x44] sm:$0xf]
      %v1642 = vld [vmem:[%s1629 + $0x48] sm:$0xff]
      %v1643 = vld [vmem:[%s1629 + $0x50] sm:$0xf]
      %v1644 = vld [vmem:[%s1629 + $0x54] sm:$0xff]
      %v1645 = vld [vmem:[%s1629 + $0x5c] sm:$0xf]
      %v1646 = vld [vmem:[%s1629 + $0x60] sm:$0xff]
      %v1647 = vld [vmem:[%s1629 + $0x68] sm:$0xf]
      %v1648 = vld [vmem:[%s1629 + $0x6c] sm:$0xff]
      %v1649 = vld [vmem:[%s1629 + $0x74] sm:$0xf]
      %v1650 = vld [vmem:[%s1629 + $0x78] sm:$0xff]
      %v1651 = vld [vmem:[%s1629 + $0x80] sm:$0xf]
      %v1652 = vld [vmem:[%s1629 + $0x84] sm:$0xff]
      %v1653 = vld [vmem:[%s1629 + $0x8c] sm:$0xf]
      %v1654 = vld [vmem:[%s1629 + $0x90] sm:$0xff]
      %v1655 = vld [vmem:[%s1629 + $0x98] sm:$0xf]
      %v1656 = vld [vmem:[%s1629 + $0x9c] sm:$0xff]
      %v1657 = vld [vmem:[%s1629 + $0xa4] sm:$0xf]
      %v1658 = vld [vmem:[%s1629 + $0xa8] sm:$0xff]
      %v1659 = vld [vmem:[%s1629 + $0xb0] sm:$0xf]
      %v1660 = vld [vmem:[%s1629 + $0xb4] sm:$0xff]
      %v1661 = vld [vmem:[%s1629 + $0xbc] sm:$0xf]
      %v1662 = vld [vmem:[%s1629 + $0xc0] sm:$0xff]
      %v1663 = vld [vmem:[%s1629 + $0xc8] sm:$0xf]
      %v1664 = vld [vmem:[%s1629 + $0xcc] sm:$0xff]
      %v1665 = vld [vmem:[%s1629 + $0xd4] sm:$0xf]
      %v1666 = vld [vmem:[%s1629 + $0xd8] sm:$0xff]
      %v1667 = vld [vmem:[%s1629 + $0xe0] sm:$0xf]
      %v1668 = vld [vmem:[%s1629 + $0xe4] sm:$0xff]
      %v1669 = vld [vmem:[%s1629 + $0xec] sm:$0xf]
      %v1670 = vld [vmem:[%s1629 + $0xf0] sm:$0xff]
      %v1671 = vld [vmem:[%s1629 + $0xf8] sm:$0xf]
      %v1672 = vld [vmem:[%s1629 + $0xfc] sm:$0xff]
      %v1673 = vld [vmem:[%s1629 + $0x104] sm:$0xf]
      %v1674 = vld [vmem:[%s1629 + $0x108] sm:$0xff]
      %v1675 = vld [vmem:[%s1629 + $0x110] sm:$0xf]
      %v1676 = vld [vmem:[%s1629 + $0x114] sm:$0xff]
      %v1677 = vld [vmem:[%s1629 + $0x11c] sm:$0xf]
      %v1678 = vld [vmem:[%s1629 + $0x120] sm:$0xff]
      %v1679 = vld [vmem:[%s1629 + $0x128] sm:$0xf]
      %v1680 = vld [vmem:[%s1629 + $0x12c] sm:$0xff]
      %v1681 = vld [vmem:[%s1629 + $0x134] sm:$0xf]
      %v1682 = vld [vmem:[%s1629 + $0x138] sm:$0xff]
      %v1683 = vld [vmem:[%s1629 + $0x140] sm:$0xf]
      %v1684 = vld [vmem:[%s1629 + $0x144] sm:$0xff]
      %v1685 = vld [vmem:[%s1629 + $0x14c] sm:$0xf]
      %v1686 = vld [vmem:[%s1629 + $0x150] sm:$0xff]
      %v1687 = vld [vmem:[%s1629 + $0x158] sm:$0xf]
      %v1688 = vld [vmem:[%s1629 + $0x15c] sm:$0xff]
      %v1689 = vld [vmem:[%s1629 + $0x164] sm:$0xf]
      %v1690 = vld [vmem:[%s1629 + $0x168] sm:$0xff]
      %v1691 = vld [vmem:[%s1629 + $0x170] sm:$0xf]
      %v1692 = vld [vmem:[%s1629 + $0x174] sm:$0xff]
      %v1693 = vld [vmem:[%s1629 + $0x17c] sm:$0xf]
      %v1694 = vld [vmem:[%s1629 + $0x180] sm:$0xff]
      %v1695 = vld [vmem:[%s1629 + $0x188] sm:$0xf]
      %v1696 = vld [vmem:[%s1629 + $0x18c] sm:$0xff]
      %v1697 = vld [vmem:[%s1629 + $0x194] sm:$0xf]
      %v1698 = vld [vmem:[%s1629 + $0x198] sm:$0xff]
      %v1699 = vld [vmem:[%s1629 + $0x1a0] sm:$0xf]
      %v1700 = vld [vmem:[%s1629 + $0x1a4] sm:$0xff]
      %v1701 = vld [vmem:[%s1629 + $0x1ac] sm:$0xf]
      %v1774 = vunpack.c.l.b16 %v1630
      %v1775 = vunpack.c.h.b16 %v1630
      %v1776 = vunpack.c.l.b16 %v1631
      %v1777 = vunpack.c.l.b16 %v1632
      %v1778 = vunpack.c.h.b16 %v1632
      %v1779 = vunpack.c.l.b16 %v1633
      %v1780 = vunpack.c.l.b16 %v1634
      %v1781 = vunpack.c.h.b16 %v1634
      %v1782 = vunpack.c.l.b16 %v1635
      %v1783 = vunpack.c.l.b16 %v1636
      %v1784 = vunpack.c.h.b16 %v1636
      %v1785 = vunpack.c.l.b16 %v1637
      %v1786 = vunpack.c.l.b16 %v1638
      %v1787 = vunpack.c.h.b16 %v1638
      %v1788 = vunpack.c.l.b16 %v1639
      %v1789 = vunpack.c.l.b16 %v1640
      %v1790 = vunpack.c.h.b16 %v1640
      %v1791 = vunpack.c.l.b16 %v1641
      %v1792 = vunpack.c.l.b16 %v1642
      %v1793 = vunpack.c.h.b16 %v1642
      %v1794 = vunpack.c.l.b16 %v1643
      %v1795 = vunpack.c.l.b16 %v1644
      %v1796 = vunpack.c.h.b16 %v1644
      %v1797 = vunpack.c.l.b16 %v1645
      %v1798 = vunpack.c.l.b16 %v1646
      %v1799 = vunpack.c.h.b16 %v1646
      %v1800 = vunpack.c.l.b16 %v1647
      %v1801 = vunpack.c.l.b16 %v1648
      %v1802 = vunpack.c.h.b16 %v1648
      %v1803 = vunpack.c.l.b16 %v1649
      %v1804 = vunpack.c.l.b16 %v1650
      %v1805 = vunpack.c.h.b16 %v1650
      %v1806 = vunpack.c.l.b16 %v1651
      %v1807 = vunpack.c.l.b16 %v1652
      %v1808 = vunpack.c.h.b16 %v1652
      %v1809 = vunpack.c.l.b16 %v1653
      %v1810 = vunpack.c.l.b16 %v1654
      %v1811 = vunpack.c.h.b16 %v1654
      %v1812 = vunpack.c.l.b16 %v1655
      %v1813 = vunpack.c.l.b16 %v1656
      %v1814 = vunpack.c.h.b16 %v1656
      %v1815 = vunpack.c.l.b16 %v1657
      %v1816 = vunpack.c.l.b16 %v1658
      %v1817 = vunpack.c.h.b16 %v1658
      %v1818 = vunpack.c.l.b16 %v1659
      %v1819 = vunpack.c.l.b16 %v1660
      %v1820 = vunpack.c.h.b16 %v1660
      %v1821 = vunpack.c.l.b16 %v1661
      %v1822 = vunpack.c.l.b16 %v1662
      %v1823 = vunpack.c.h.b16 %v1662
      %v1824 = vunpack.c.l.b16 %v1663
      %v1825 = vunpack.c.l.b16 %v1664
      %v1826 = vunpack.c.h.b16 %v1664
      %v1827 = vunpack.c.l.b16 %v1665
      %v1828 = vunpack.c.l.b16 %v1666
      %v1829 = vunpack.c.h.b16 %v1666
      %v1830 = vunpack.c.l.b16 %v1667
      %v1831 = vunpack.c.l.b16 %v1668
      %v1832 = vunpack.c.h.b16 %v1668
      %v1833 = vunpack.c.l.b16 %v1669
      %v1834 = vunpack.c.l.b16 %v1670
      %v1835 = vunpack.c.h.b16 %v1670
      %v1836 = vunpack.c.l.b16 %v1671
      %v1837 = vunpack.c.l.b16 %v1672
      %v1838 = vunpack.c.h.b16 %v1672
      %v1839 = vunpack.c.l.b16 %v1673
      %v1840 = vunpack.c.l.b16 %v1674
      %v1841 = vunpack.c.h.b16 %v1674
      %v1842 = vunpack.c.l.b16 %v1675
      %v1843 = vunpack.c.l.b16 %v1676
      %v1844 = vunpack.c.h.b16 %v1676
      %v1845 = vunpack.c.l.b16 %v1677
      %v1846 = vunpack.c.l.b16 %v1678
      %v1847 = vunpack.c.h.b16 %v1678
      %v1848 = vunpack.c.l.b16 %v1679
      %v1849 = vunpack.c.l.b16 %v1680
      %v1850 = vunpack.c.h.b16 %v1680
      %v1851 = vunpack.c.l.b16 %v1681
      %v1852 = vunpack.c.l.b16 %v1682
      %v1853 = vunpack.c.h.b16 %v1682
      %v1854 = vunpack.c.l.b16 %v1683
      %v1855 = vunpack.c.l.b16 %v1684
      %v1856 = vunpack.c.h.b16 %v1684
      %v1857 = vunpack.c.l.b16 %v1685
      %v1858 = vunpack.c.l.b16 %v1686
      %v1859 = vunpack.c.h.b16 %v1686
      %v1860 = vunpack.c.l.b16 %v1687
      %v1861 = vunpack.c.l.b16 %v1688
      %v1862 = vunpack.c.h.b16 %v1688
      %v1863 = vunpack.c.l.b16 %v1689
      %v1864 = vunpack.c.l.b16 %v1690
      %v1865 = vunpack.c.h.b16 %v1690
      %v1866 = vunpack.c.l.b16 %v1691
      %v1867 = vunpack.c.l.b16 %v1692
      %v1868 = vunpack.c.h.b16 %v1692
      %v1869 = vunpack.c.l.b16 %v1693
      %v1870 = vunpack.c.l.b16 %v1694
      %v1871 = vunpack.c.h.b16 %v1694
      %v1872 = vunpack.c.l.b16 %v1695
      %v1873 = vunpack.c.l.b16 %v1696
      %v1874 = vunpack.c.h.b16 %v1696
      %v1875 = vunpack.c.l.b16 %v1697
      %v1876 = vunpack.c.l.b16 %v1698
      %v1877 = vunpack.c.h.b16 %v1698
      %v1878 = vunpack.c.l.b16 %v1699
      %v1879 = vunpack.c.l.b16 %v1700
      %v1880 = vunpack.c.h.b16 %v1700
      %v1881 = vunpack.c.l.b16 %v1701
      %v1882 = vpack.c.b16 %v1777, %v1774
      %v1883 = vpack.c.b16 %v1778, %v1775
      %v1884 = vpack.c.b16 %v1779, %v1776
      %v1885 = vpack.c.b16 %v1783, %v1780
      %v1886 = vpack.c.b16 %v1784, %v1781
      %v1887 = vpack.c.b16 %v1785, %v1782
      %v1888 = vpack.c.b16 %v1789, %v1786
      %v1889 = vpack.c.b16 %v1790, %v1787
      %v1890 = vpack.c.b16 %v1791, %v1788
      %v1891 = vpack.c.b16 %v1795, %v1792
      %v1892 = vpack.c.b16 %v1796, %v1793
      %v1893 = vpack.c.b16 %v1797, %v1794
      %v1894 = vpack.c.b16 %v1801, %v1798
      %v1895 = vpack.c.b16 %v1802, %v1799
      %v1896 = vpack.c.b16 %v1803, %v1800
      %v1897 = vpack.c.b16 %v1807, %v1804
      %v1898 = vpack.c.b16 %v1808, %v1805
      %v1899 = vpack.c.b16 %v1809, %v1806
      %v1900 = vpack.c.b16 %v1813, %v1810
      %v1901 = vpack.c.b16 %v1814, %v1811
      %v1902 = vpack.c.b16 %v1815, %v1812
      %v1903 = vpack.c.b16 %v1819, %v1816
      %v1904 = vpack.c.b16 %v1820, %v1817
      %v1905 = vpack.c.b16 %v1821, %v1818
      %v1906 = vpack.c.b16 %v1825, %v1822
      %v1907 = vpack.c.b16 %v1826, %v1823
      %v1908 = vpack.c.b16 %v1827, %v1824
      %v1909 = vpack.c.b16 %v1831, %v1828
      %v1910 = vpack.c.b16 %v1832, %v1829
      %v1911 = vpack.c.b16 %v1833, %v1830
      %v1912 = vpack.c.b16 %v1837, %v1834
      %v1913 = vpack.c.b16 %v1838, %v1835
      %v1914 = vpack.c.b16 %v1839, %v1836
      %v1915 = vpack.c.b16 %v1843, %v1840
      %v1916 = vpack.c.b16 %v1844, %v1841
      %v1917 = vpack.c.b16 %v1845, %v1842
      %v1918 = vpack.c.b16 %v1849, %v1846
      %v1919 = vpack.c.b16 %v1850, %v1847
      %v1920 = vpack.c.b16 %v1851, %v1848
      %v1921 = vpack.c.b16 %v1855, %v1852
      %v1922 = vpack.c.b16 %v1856, %v1853
      %v1923 = vpack.c.b16 %v1857, %v1854
      %v1924 = vpack.c.b16 %v1861, %v1858
      %v1925 = vpack.c.b16 %v1862, %v1859
      %v1926 = vpack.c.b16 %v1863, %v1860
      %v1927 = vpack.c.b16 %v1867, %v1864
      %v1928 = vpack.c.b16 %v1868, %v1865
      %v1929 = vpack.c.b16 %v1869, %v1866
      %v1930 = vpack.c.b16 %v1873, %v1870
      %v1931 = vpack.c.b16 %v1874, %v1871
      %v1932 = vpack.c.b16 %v1875, %v1872
      %v1933 = vpack.c.b16 %v1879, %v1876
      %v1934 = vpack.c.b16 %v1880, %v1877
      %v1935 = vpack.c.b16 %v1881, %v1878
      %v1991 = vsel %vm984, %v1628, 0
      %1993 = vmatprep.subr.bf16.mxu0 %v1883
      %1994 = vmatpush1.bf16.msra.mxu0 %v1882
      %1995 = vmatprep.subr.bf16.mxu0 %v1886
      %1996 = vmatpush1.bf16.msra.mxu0 %v1885
      %1997 = vmatprep.subr.bf16.mxu0 %v1889
      %1998 = vmatpush1.bf16.msra.mxu0 %v1888
      %1999 = vmatprep.subr.bf16.mxu0 %v1892
      %2000 = vmatpush1.bf16.msra.mxu0 %v1891
      %2001 = vmatprep.subr.bf16.mxu0 %v1895
      %2002 = vmatpush1.bf16.msra.mxu0 %v1894
      %2003 = vmatprep.subr.bf16.mxu0 %v1898
      %2004 = vmatpush1.bf16.msra.mxu0 %v1897
      %2005 = vmatprep.subr.bf16.mxu0 %v1901
      %2006 = vmatpush1.bf16.msra.mxu0 %v1900
      %2007 = vmatprep.subr.bf16.mxu0 %v1904
      %2008 = vmatpush1.bf16.msra.mxu0 %v1903
      %2009 = vmatprep.subr.bf16.mxu0 %v1907
      %2010 = vmatpush1.bf16.msra.mxu0 %v1906
      %2011 = vmatprep.subr.bf16.mxu0 %v1910
      %2012 = vmatpush1.bf16.msra.mxu0 %v1909
      %2013 = vmatprep.subr.bf16.mxu0 %v1913
      %2014 = vmatpush1.bf16.msra.mxu0 %v1912
      %2015 = vmatprep.subr.bf16.mxu0 %v1916
      %2016 = vmatpush1.bf16.msra.mxu0 %v1915
      %2017 = vmatprep.subr.bf16.mxu0 %v1919
      %2018 = vmatpush1.bf16.msra.mxu0 %v1918
      %2019 = vmatprep.subr.bf16.mxu0 %v1922
      %2020 = vmatpush1.bf16.msra.mxu0 %v1921
      %2021 = vmatprep.subr.bf16.mxu0 %v1925
      %2022 = vmatpush1.bf16.msra.mxu0 %v1924
      %2023 = vmatprep.subr.bf16.mxu0 %v1928
      %2024 = vmatpush1.bf16.msra.mxu0 %v1927
      %2025 = vmatprep.mubr.bf16.mxu0 %v1627
      %2026 = vmatmul.mubr.bf16.gmra.mrb[0].mxu0 %v1626
      %v2027 = vpop.f32.mrb[0].mxu0
      %v2028 = vadd.f32 0.0, %v2027
      %v2029 = vpop.f32.mrb[0].mxu0
      %v2030 = vadd.f32 0.0, %v2029
      %v2031 = vpop.f32.mrb[0].mxu0
      %v2032 = vadd.f32 0.0, %v2031
      %v2033 = vpop.f32.mrb[0].mxu0
      %v2034 = vadd.f32 0.0, %v2033
      %2035 = vdwg.mxu0
      %2036 = vmatprep.subr.bf16.mxu0 %v1931
      %2037 = vmatpush1.bf16.msra.mxu0 %v1930
      %2038 = vmatprep.subr.bf16.mxu0 %v1934
      %2039 = vmatpush1.bf16.msra.mxu0 %v1933
      %2040 = vmatprep.subr.bf16.mxu0 0
      %2041 = vmatpush1.bf16.msra.mxu0 0
      %2042 = vmatprep.subr.bf16.mxu0 0
      %2043 = vmatpush1.bf16.msra.mxu0 0
      %2044 = vmatprep.subr.bf16.mxu0 0
      %2045 = vmatpush1.bf16.msra.mxu0 0
      %2046 = vmatprep.subr.bf16.mxu0 0
      %2047 = vmatpush1.bf16.msra.mxu0 0
      %2048 = vmatprep.subr.bf16.mxu0 0
      %2049 = vmatpush1.bf16.msra.mxu0 0
      %2050 = vmatprep.subr.bf16.mxu0 0
      %2051 = vmatpush1.bf16.msra.mxu0 0
      %2052 = vmatprep.subr.bf16.mxu0 0
      %2053 = vmatpush1.bf16.msra.mxu0 0
      %2054 = vmatprep.subr.bf16.mxu0 0
      %2055 = vmatpush1.bf16.msra.mxu0 0
      %2056 = vmatprep.subr.bf16.mxu0 0
      %2057 = vmatpush1.bf16.msra.mxu0 0
      %2058 = vmatprep.subr.bf16.mxu0 0
      %2059 = vmatpush1.bf16.msra.mxu0 0
      %2060 = vmatprep.subr.bf16.mxu0 0
      %2061 = vmatpush1.bf16.msra.mxu0 0
      %2062 = vmatprep.subr.bf16.mxu0 0
      %2063 = vmatpush1.bf16.msra.mxu0 0
      %2064 = vmatprep.subr.bf16.mxu0 0
      %2065 = vmatpush1.bf16.msra.mxu0 0
      %2066 = vmatprep.subr.bf16.mxu0 0
      %2067 = vmatpush1.bf16.msra.mxu0 0
      %2068 = vmatprep.mubr.bf16.mxu0 0
      %2069 = vmatmul.mubr.bf16.gmra.mrb[0].mxu0 %v1991
      %v2070 = vpop.f32.mrb[0].mxu0
      %v2071 = vadd.f32 %v2028, %v2070
      %v2072 = vpop.f32.mrb[0].mxu0
      %v2073 = vadd.f32 %v2030, %v2072
      %v2074 = vpop.f32.mrb[0].mxu0
      %v2075 = vadd.f32 %v2032, %v2074
      %v2076 = vpop.f32.mrb[0].mxu0
      %v2077 = vadd.f32 %v2034, %v2076
      %2078 = vdwg.mxu0
      %2079 = vmatprep.subr.bf16.mxu0 0
      %2080 = vmatpush1.bf16.msra.mxu0 %v1884
      %2081 = vmatprep.subr.bf16.mxu0 0
      %2082 = vmatpush1.bf16.msra.mxu0 %v1887
      %2083 = vmatprep.subr.bf16.mxu0 0
      %2084 = vmatpush1.bf16.msra.mxu0 %v1890
      %2085 = vmatprep.subr.bf16.mxu0 0
      %2086 = vmatpush1.bf16.msra.mxu0 %v1893
      %2087 = vmatprep.subr.bf16.mxu0 0
      %2088 = vmatpush1.bf16.msra.mxu0 %v1896
      %2089 = vmatprep.subr.bf16.mxu0 0
      %2090 = vmatpush1.bf16.msra.mxu0 %v1899
      %2091 = vmatprep.subr.bf16.mxu0 0
      %2092 = vmatpush1.bf16.msra.mxu0 %v1902
      %2093 = vmatprep.subr.bf16.mxu0 0
      %2094 = vmatpush1.bf16.msra.mxu0 %v1905
      %2095 = vmatprep.subr.bf16.mxu0 0
      %2096 = vmatpush1.bf16.msra.mxu0 %v1908
      %2097 = vmatprep.subr.bf16.mxu0 0
      %2098 = vmatpush1.bf16.msra.mxu0 %v1911
      %2099 = vmatprep.subr.bf16.mxu0 0
      %2100 = vmatpush1.bf16.msra.mxu0 %v1914
      %2101 = vmatprep.subr.bf16.mxu0 0
      %2102 = vmatpush1.bf16.msra.mxu0 %v1917
      %2103 = vmatprep.subr.bf16.mxu0 0
      %2104 = vmatpush1.bf16.msra.mxu0 %v1920
      %2105 = vmatprep.subr.bf16.mxu0 0
      %2106 = vmatpush1.bf16.msra.mxu0 %v1923
      %2107 = vmatprep.subr.bf16.mxu0 0
      %2108 = vmatpush1.bf16.msra.mxu0 %v1926
      %2109 = vmatprep.subr.bf16.mxu0 0
      %2110 = vmatpush1.bf16.msra.mxu0 %v1929
      %2111 = vmatprep.mubr.bf16.mxu0 %v1627
      %2112 = vmatmul.mubr.bf16.gmra.mrb[0].mxu0 %v1626
      %v2113 = vpop.f32.mrb[0].mxu0
      %v2114 = vadd.f32 0.0, %v2113
      %v2115 = vpop.f32.mrb[0].mxu0
      %v2116 = vpop.f32.mrb[0].mxu0
      %v2117 = vadd.f32 0.0, %v2116
      %v2118 = vpop.f32.mrb[0].mxu0
      %2119 = vdwg.mxu0
      %2120 = vmatprep.subr.bf16.mxu0 0
      %2121 = vmatpush1.bf16.msra.mxu0 %v1932
      %2122 = vmatprep.subr.bf16.mxu0 0
      %2123 = vmatpush1.bf16.msra.mxu0 %v1935
      %2124 = vmatprep.subr.bf16.mxu0 0
      %2125 = vmatpush1.bf16.msra.mxu0 0
      %2126 = vmatprep.subr.bf16.mxu0 0
      %2127 = vmatpush1.bf16.msra.mxu0 0
      %2128 = vmatprep.subr.bf16.mxu0 0
      %2129 = vmatpush1.bf16.msra.mxu0 0
      %2130 = vmatprep.subr.bf16.mxu0 0
      %2131 = vmatpush1.bf16.msra.mxu0 0
      %2132 = vmatprep.subr.bf16.mxu0 0
      %2133 = vmatpush1.bf16.msra.mxu0 0
      %2134 = vmatprep.subr.bf16.mxu0 0
      %2135 = vmatpush1.bf16.msra.mxu0 0
      %2136 = vmatprep.subr.bf16.mxu0 0
      %2137 = vmatpush1.bf16.msra.mxu0 0
      %2138 = vmatprep.subr.bf16.mxu0 0
      %2139 = vmatpush1.bf16.msra.mxu0 0
      %2140 = vmatprep.subr.bf16.mxu0 0
      %2141 = vmatpush1.bf16.msra.mxu0 0
      %2142 = vmatprep.subr.bf16.mxu0 0
      %2143 = vmatpush1.bf16.msra.mxu0 0
      %2144 = vmatprep.subr.bf16.mxu0 0
      %2145 = vmatpush1.bf16.msra.mxu0 0
      %2146 = vmatprep.subr.bf16.mxu0 0
      %2147 = vmatpush1.bf16.msra.mxu0 0
      %2148 = vmatprep.subr.bf16.mxu0 0
      %2149 = vmatpush1.bf16.msra.mxu0 0
      %2150 = vmatprep.subr.bf16.mxu0 0
      %2151 = vmatpush1.bf16.msra.mxu0 0
      %2152 = vmatprep.mubr.bf16.mxu0 0
      %2153 = vmatmul.mubr.bf16.gmra.mrb[0].mxu0 %v1991
      %v2154 = vpop.f32.mrb[0].mxu0
      %v2155 = vadd.f32 %v2114, %v2154
      %v2156 = vpop.f32.mrb[0].mxu0
      %v2157 = vpop.f32.mrb[0].mxu0
      %v2158 = vadd.f32 %v2117, %v2157
      %v2159 = vpop.f32.mrb[0].mxu0
      %2160 = vdwg.mxu0
      %v2161 = vadd.f32 %v1524, %v2071
      %v2162 = vadd.f32 %v1526, %v2073
      %v2163 = vadd.f32 %v1608, %v2155
      %v2164 = vadd.f32 %v1528, %v2075
      %v2165 = vadd.f32 %v1530, %v2077
      %v2166 = vadd.f32 %v1611, %v2158
      %v2167 = vld [vmem:[%s4] sm:$0x7]
      %v2169 = vlaneseq
      %v2170 = vshrl.u32 %v2169, 7
      %v2171 = vsub.s32 0, %v2170
      %v2172 = vrot.slane %v2167, %v2171
      %v2173 = vlaneseq
      %v2174 = vshrl.u32 %v2173, 7
      %v2175 = vsub.s32 1, %v2174
      %v2176 = vrot.slane %v2167, %v2175
      %v2177 = vlaneseq
      %v2178 = vshrl.u32 %v2177, 7
      %v2179 = vsub.s32 2, %v2178
      %v2180 = vrot.slane %v2167, %v2179
      %v2184 = vadd.f32 %v2161, %v2172
      %v2185 = vadd.f32 %v2162, %v2176
      %v2186 = vadd.f32 %v2163, %v2180
      %v2187 = vadd.f32 %v2164, %v2172
      %v2188 = vadd.f32 %v2165, %v2176
      %v2189 = vadd.f32 %v2166, %v2180
      %v2190 = vmax.f32 %v2184, 0.0
      %v2191 = vmax.f32 %v2185, 0.0
      %v2192 = vmax.f32 %v2186, 0.0
      %v2193 = vmax.f32 %v2187, 0.0
      %v2194 = vmax.f32 %v2188, 0.0
      %v2195 = vmax.f32 %v2189, 0.0
      %2196 = vst [vmem:[%s313] sm:$0xff] %v2190
      %2197 = vst [vmem:[%s313 + $0x8] sm:$0xff] %v2193
      %v2198 = vpack.c.bf16 %v2194, %v2191
      %v2199 = vpack.c.bf16 %v2195, %v2192
      %v2201 = vshrl.u32 %v2198, 16
      %v2203 = vrot.slane %v2201, 7
      %v2204 = vshll.u32 %v2198, 16
      %v2206 = vor.u32 %v2203, %v2204
      %v2208 = vshrl.u32 %v2199, 16
      %v2210 = vrot.slane %v2208, 7
      %v2211 = vshll.u32 %v2199, 16
      %v2213 = vor.u32 %v2210, %v2211
      %v2216 = vsel %vm547, 0, %v2206
      %v2217 = vsel %vm547, 0, %v2213
      %v2218 = vld [vmem:[%s5] sm:$0xf]
      %v2219 = vld [vmem:[%s5 + $0x4] sm:$0xf]
      %v2220 = vld [vmem:[%s5 + $0x8] sm:$0xf]
      %v2221 = vld [vmem:[%s5 + $0xc] sm:$0xf]
      %v2222 = vld [vmem:[%s5 + $0x10] sm:$0xf]
      %v2223 = vld [vmem:[%s5 + $0x14] sm:$0xf]
      %v2224 = vld [vmem:[%s5 + $0x18] sm:$0xf]
      %v2225 = vld [vmem:[%s5 + $0x1c] sm:$0xf]
      %v2226 = vld [vmem:[%s5 + $0x20] sm:$0xf]
      %v2227 = vld [vmem:[%s5 + $0x24] sm:$0xf]
      %v2228 = vld [vmem:[%s5 + $0x28] sm:$0xf]
      %v2229 = vld [vmem:[%s5 + $0x2c] sm:$0xf]
      %v2230 = vld [vmem:[%s5 + $0x30] sm:$0xf]
      %v2231 = vld [vmem:[%s5 + $0x34] sm:$0xf]
      %v2232 = vld [vmem:[%s5 + $0x38] sm:$0xf]
      %v2233 = vld [vmem:[%s5 + $0x3c] sm:$0xf]
      %v2234 = vld [vmem:[%s5 + $0x40] sm:$0xf]
      %v2235 = vld [vmem:[%s5 + $0x44] sm:$0xf]
      %s2236 = scalar_lea.vmem %s5, 72
      %v2237 = vld [vmem:[%s2236] sm:$0xf]
      %v2238 = vld [vmem:[%s2236 + $0x4] sm:$0xf]
      %v2239 = vld [vmem:[%s2236 + $0x8] sm:$0xf]
      %v2240 = vld [vmem:[%s2236 + $0xc] sm:$0xf]
      %v2241 = vld [vmem:[%s2236 + $0x10] sm:$0xf]
      %v2242 = vld [vmem:[%s2236 + $0x14] sm:$0xf]
      %v2243 = vld [vmem:[%s2236 + $0x18] sm:$0xf]
      %v2244 = vld [vmem:[%s2236 + $0x1c] sm:$0xf]
      %v2245 = vld [vmem:[%s2236 + $0x20] sm:$0xf]
      %v2246 = vld [vmem:[%s2236 + $0x24] sm:$0xf]
      %v2247 = vld [vmem:[%s2236 + $0x28] sm:$0xf]
      %v2248 = vld [vmem:[%s2236 + $0x2c] sm:$0xf]
      %v2249 = vld [vmem:[%s2236 + $0x30] sm:$0xf]
      %v2250 = vld [vmem:[%s2236 + $0x34] sm:$0xf]
      %v2251 = vld [vmem:[%s2236 + $0x38] sm:$0xf]
      %v2252 = vld [vmem:[%s2236 + $0x3c] sm:$0xf]
      %v2253 = vld [vmem:[%s2236 + $0x40] sm:$0xf]
      %v2254 = vld [vmem:[%s2236 + $0x44] sm:$0xf]
      %v2273 = vunpack.c.l.b16 %v2237
      %v2274 = vunpack.c.l.b16 %v2238
      %v2275 = vunpack.c.l.b16 %v2239
      %v2276 = vunpack.c.l.b16 %v2240
      %v2277 = vunpack.c.l.b16 %v2241
      %v2278 = vunpack.c.l.b16 %v2242
      %v2279 = vunpack.c.l.b16 %v2243
      %v2280 = vunpack.c.l.b16 %v2244
      %v2281 = vunpack.c.l.b16 %v2245
      %v2282 = vunpack.c.l.b16 %v2246
      %v2283 = vunpack.c.l.b16 %v2247
      %v2284 = vunpack.c.l.b16 %v2248
      %v2285 = vunpack.c.l.b16 %v2249
      %v2286 = vunpack.c.l.b16 %v2250
      %v2287 = vunpack.c.l.b16 %v2251
      %v2288 = vunpack.c.l.b16 %v2252
      %v2289 = vunpack.c.l.b16 %v2253
      %v2290 = vunpack.c.l.b16 %v2254
      %v2291 = vpack.c.b16 %v2274, %v2273
      %v2292 = vpack.c.b16 %v2276, %v2275
      %v2293 = vpack.c.b16 %v2278, %v2277
      %v2294 = vpack.c.b16 %v2280, %v2279
      %v2295 = vpack.c.b16 %v2282, %v2281
      %v2296 = vpack.c.b16 %v2284, %v2283
      %v2297 = vpack.c.b16 %v2286, %v2285
      %v2298 = vpack.c.b16 %v2288, %v2287
      %v2299 = vpack.c.b16 %v2290, %v2289
      %vm2309 = vcmask 130048
      %v2310 = vsel %vm2309, %v2199, 0
      %2312 = vmatprep.subr.bf16.mxu0 0
      %2313 = vmatpush1.bf16.msra.mxu0 %v2291
      %2314 = vmatprep.subr.bf16.mxu0 0
      %2315 = vmatpush1.bf16.msra.mxu0 %v2292
      %2316 = vmatprep.subr.bf16.mxu0 0
      %2317 = vmatpush1.bf16.msra.mxu0 %v2293
      %2318 = vmatprep.subr.bf16.mxu0 0
      %2319 = vmatpush1.bf16.msra.mxu0 %v2294
      %2320 = vmatprep.subr.bf16.mxu0 0
      %2321 = vmatpush1.bf16.msra.mxu0 %v2295
      %2322 = vmatprep.subr.bf16.mxu0 0
      %2323 = vmatpush1.bf16.msra.mxu0 %v2296
      %2324 = vmatprep.subr.bf16.mxu0 0
      %2325 = vmatpush1.bf16.msra.mxu0 %v2297
      %2326 = vmatprep.subr.bf16.mxu0 0
      %2327 = vmatpush1.bf16.msra.mxu0 %v2298
      %2328 = vmatprep.subr.bf16.mxu0 0
      %2329 = vmatpush1.bf16.msra.mxu0 %v2299
      %2330 = vmatprep.subr.bf16.mxu0 0
      %2331 = vmatpush1.bf16.msra.mxu0 0
      %2332 = vmatprep.subr.bf16.mxu0 0
      %2333 = vmatpush1.bf16.msra.mxu0 0
      %2334 = vmatprep.subr.bf16.mxu0 0
      %2335 = vmatpush1.bf16.msra.mxu0 0
      %2336 = vmatprep.subr.bf16.mxu0 0
      %2337 = vmatpush1.bf16.msra.mxu0 0
      %2338 = vmatprep.subr.bf16.mxu0 0
      %2339 = vmatpush1.bf16.msra.mxu0 0
      %2340 = vmatprep.subr.bf16.mxu0 0
      %2341 = vmatpush1.bf16.msra.mxu0 0
      %2342 = vmatprep.subr.bf16.mxu0 0
      %2343 = vmatpush1.bf16.msra.mxu0 0
      %2344 = vmatprep.mubr.bf16.mxu0 %v2310
      %2345 = vmatmul.mubr.bf16.gmra.mrb[0].mxu0 %v2198
      %v2346 = vpop.f32.mrb[0].mxu0
      %v2347 = vadd.f32 0.0, %v2346
      %v2348 = vpop.f32.mrb[0].mxu0
      %v2349 = vpop.f32.mrb[0].mxu0
      %v2350 = vadd.f32 0.0, %v2349
      %v2351 = vpop.f32.mrb[0].mxu0
      %2352 = vdwg.mxu0
      %v2371 = vunpack.c.l.b16 %v2218
      %v2372 = vunpack.c.l.b16 %v2219
      %v2373 = vunpack.c.l.b16 %v2220
      %v2374 = vunpack.c.l.b16 %v2221
      %v2375 = vunpack.c.l.b16 %v2222
      %v2376 = vunpack.c.l.b16 %v2223
      %v2377 = vunpack.c.l.b16 %v2224
      %v2378 = vunpack.c.l.b16 %v2225
      %v2379 = vunpack.c.l.b16 %v2226
      %v2380 = vunpack.c.l.b16 %v2227
      %v2381 = vunpack.c.l.b16 %v2228
      %v2382 = vunpack.c.l.b16 %v2229
      %v2383 = vunpack.c.l.b16 %v2230
      %v2384 = vunpack.c.l.b16 %v2231
      %v2385 = vunpack.c.l.b16 %v2232
      %v2386 = vunpack.c.l.b16 %v2233
      %v2387 = vunpack.c.l.b16 %v2234
      %v2388 = vunpack.c.l.b16 %v2235
      %v2389 = vpack.c.b16 %v2372, %v2371
      %v2390 = vpack.c.b16 %v2374, %v2373
      %v2391 = vpack.c.b16 %v2376, %v2375
      %v2392 = vpack.c.b16 %v2378, %v2377
      %v2393 = vpack.c.b16 %v2380, %v2379
      %v2394 = vpack.c.b16 %v2382, %v2381
      %v2395 = vpack.c.b16 %v2384, %v2383
      %v2396 = vpack.c.b16 %v2386, %v2385
      %v2397 = vpack.c.b16 %v2388, %v2387
      %v2408 = vsel %vm2309, %v2217, 0
      %2410 = vmatprep.subr.bf16.mxu0 0
      %2411 = vmatpush1.bf16.msra.mxu0 %v2389
      %2412 = vmatprep.subr.bf16.mxu0 0
      %2413 = vmatpush1.bf16.msra.mxu0 %v2390
      %2414 = vmatprep.subr.bf16.mxu0 0
      %2415 = vmatpush1.bf16.msra.mxu0 %v2391
      %2416 = vmatprep.subr.bf16.mxu0 0
      %2417 = vmatpush1.bf16.msra.mxu0 %v2392
      %2418 = vmatprep.subr.bf16.mxu0 0
      %2419 = vmatpush1.bf16.msra.mxu0 %v2393
      %2420 = vmatprep.subr.bf16.mxu0 0
      %2421 = vmatpush1.bf16.msra.mxu0 %v2394
      %2422 = vmatprep.subr.bf16.mxu0 0
      %2423 = vmatpush1.bf16.msra.mxu0 %v2395
      %2424 = vmatprep.subr.bf16.mxu0 0
      %2425 = vmatpush1.bf16.msra.mxu0 %v2396
      %2426 = vmatprep.subr.bf16.mxu0 0
      %2427 = vmatpush1.bf16.msra.mxu0 %v2397
      %2428 = vmatprep.subr.bf16.mxu0 0
      %2429 = vmatpush1.bf16.msra.mxu0 0
      %2430 = vmatprep.subr.bf16.mxu0 0
      %2431 = vmatpush1.bf16.msra.mxu0 0
      %2432 = vmatprep.subr.bf16.mxu0 0
      %2433 = vmatpush1.bf16.msra.mxu0 0
      %2434 = vmatprep.subr.bf16.mxu0 0
      %2435 = vmatpush1.bf16.msra.mxu0 0
      %2436 = vmatprep.subr.bf16.mxu0 0
      %2437 = vmatpush1.bf16.msra.mxu0 0
      %2438 = vmatprep.subr.bf16.mxu0 0
      %2439 = vmatpush1.bf16.msra.mxu0 0
      %2440 = vmatprep.subr.bf16.mxu0 0
      %2441 = vmatpush1.bf16.msra.mxu0 0
      %2442 = vmatprep.mubr.bf16.mxu0 %v2408
      %2443 = vmatmul.mubr.bf16.gmra.mrb[0].mxu0 %v2216
      %v2444 = vpop.f32.mrb[0].mxu0
      %v2445 = vadd.f32 %v2347, %v2444
      %v2446 = vpop.f32.mrb[0].mxu0
      %v2447 = vpop.f32.mrb[0].mxu0
      %v2448 = vadd.f32 %v2350, %v2447
      %v2449 = vpop.f32.mrb[0].mxu0
      %2450 = vdwg.mxu0
      %v2451 = vrot.slane %v2204, 1
      %v2452 = vor.u32 %v2201, %v2451
      %v2453 = vrot.slane %v2211, 1
      %v2454 = vor.u32 %v2208, %v2453
      %v2457 = vsel %vm1625, %v2452, 0
      %v2458 = vsel %vm1625, %v2454, 0
      %s2459 = scalar_lea.vmem %s5, 144
      %v2460 = vld [vmem:[%s2459] sm:$0xf]
      %v2461 = vld [vmem:[%s2459 + $0x4] sm:$0xf]
      %v2462 = vld [vmem:[%s2459 + $0x8] sm:$0xf]
      %v2463 = vld [vmem:[%s2459 + $0xc] sm:$0xf]
      %v2464 = vld [vmem:[%s2459 + $0x10] sm:$0xf]
      %v2465 = vld [vmem:[%s2459 + $0x14] sm:$0xf]
      %v2466 = vld [vmem:[%s2459 + $0x18] sm:$0xf]
      %v2467 = vld [vmem:[%s2459 + $0x1c] sm:$0xf]
      %v2468 = vld [vmem:[%s2459 + $0x20] sm:$0xf]
      %v2469 = vld [vmem:[%s2459 + $0x24] sm:$0xf]
      %v2470 = vld [vmem:[%s2459 + $0x28] sm:$0xf]
      %v2471 = vld [vmem:[%s2459 + $0x2c] sm:$0xf]
      %v2472 = vld [vmem:[%s2459 + $0x30] sm:$0xf]
      %v2473 = vld [vmem:[%s2459 + $0x34] sm:$0xf]
      %v2474 = vld [vmem:[%s2459 + $0x38] sm:$0xf]
      %v2475 = vld [vmem:[%s2459 + $0x3c] sm:$0xf]
      %v2476 = vld [vmem:[%s2459 + $0x40] sm:$0xf]
      %v2477 = vld [vmem:[%s2459 + $0x44] sm:$0xf]
      %v2496 = vunpack.c.l.b16 %v2460
      %v2497 = vunpack.c.l.b16 %v2461
      %v2498 = vunpack.c.l.b16 %v2462
      %v2499 = vunpack.c.l.b16 %v2463
      %v2500 = vunpack.c.l.b16 %v2464
      %v2501 = vunpack.c.l.b16 %v2465
      %v2502 = vunpack.c.l.b16 %v2466
      %v2503 = vunpack.c.l.b16 %v2467
      %v2504 = vunpack.c.l.b16 %v2468
      %v2505 = vunpack.c.l.b16 %v2469
      %v2506 = vunpack.c.l.b16 %v2470
      %v2507 = vunpack.c.l.b16 %v2471
      %v2508 = vunpack.c.l.b16 %v2472
      %v2509 = vunpack.c.l.b16 %v2473
      %v2510 = vunpack.c.l.b16 %v2474
      %v2511 = vunpack.c.l.b16 %v2475
      %v2512 = vunpack.c.l.b16 %v2476
      %v2513 = vunpack.c.l.b16 %v2477
      %v2514 = vpack.c.b16 %v2497, %v2496
      %v2515 = vpack.c.b16 %v2499, %v2498
      %v2516 = vpack.c.b16 %v2501, %v2500
      %v2517 = vpack.c.b16 %v2503, %v2502
      %v2518 = vpack.c.b16 %v2505, %v2504
      %v2519 = vpack.c.b16 %v2507, %v2506
      %v2520 = vpack.c.b16 %v2509, %v2508
      %v2521 = vpack.c.b16 %v2511, %v2510
      %v2522 = vpack.c.b16 %v2513, %v2512
      %v2533 = vsel %vm2309, %v2458, 0
      %2535 = vmatprep.subr.bf16.mxu0 0
      %2536 = vmatpush1.bf16.msra.mxu0 %v2514
      %2537 = vmatprep.subr.bf16.mxu0 0
      %2538 = vmatpush1.bf16.msra.mxu0 %v2515
      %2539 = vmatprep.subr.bf16.mxu0 0
      %2540 = vmatpush1.bf16.msra.mxu0 %v2516
      %2541 = vmatprep.subr.bf16.mxu0 0
      %2542 = vmatpush1.bf16.msra.mxu0 %v2517
      %2543 = vmatprep.subr.bf16.mxu0 0
      %2544 = vmatpush1.bf16.msra.mxu0 %v2518
      %2545 = vmatprep.subr.bf16.mxu0 0
      %2546 = vmatpush1.bf16.msra.mxu0 %v2519
      %2547 = vmatprep.subr.bf16.mxu0 0
      %2548 = vmatpush1.bf16.msra.mxu0 %v2520
      %2549 = vmatprep.subr.bf16.mxu0 0
      %2550 = vmatpush1.bf16.msra.mxu0 %v2521
      %2551 = vmatprep.subr.bf16.mxu0 0
      %2552 = vmatpush1.bf16.msra.mxu0 %v2522
      %2553 = vmatprep.subr.bf16.mxu0 0
      %2554 = vmatpush1.bf16.msra.mxu0 0
      %2555 = vmatprep.subr.bf16.mxu0 0
      %2556 = vmatpush1.bf16.msra.mxu0 0
      %2557 = vmatprep.subr.bf16.mxu0 0
      %2558 = vmatpush1.bf16.msra.mxu0 0
      %2559 = vmatprep.subr.bf16.mxu0 0
      %2560 = vmatpush1.bf16.msra.mxu0 0
      %2561 = vmatprep.subr.bf16.mxu0 0
      %2562 = vmatpush1.bf16.msra.mxu0 0
      %2563 = vmatprep.subr.bf16.mxu0 0
      %2564 = vmatpush1.bf16.msra.mxu0 0
      %2565 = vmatprep.subr.bf16.mxu0 0
      %2566 = vmatpush1.bf16.msra.mxu0 0
      %2567 = vmatprep.mubr.bf16.mxu0 %v2533
      %2568 = vmatmul.mubr.bf16.gmra.mrb[0].mxu0 %v2457
      %v2569 = vpop.f32.mrb[0].mxu0
      %v2570 = vadd.f32 0.0, %v2569
      %v2571 = vpop.f32.mrb[0].mxu0
      %v2572 = vpop.f32.mrb[0].mxu0
      %v2573 = vadd.f32 0.0, %v2572
      %v2574 = vpop.f32.mrb[0].mxu0
      %2575 = vdwg.mxu0
      %v2576 = vadd.f32 %v2445, %v2570
      %v2577 = vadd.f32 %v2448, %v2573
      %v2578 = vld [vmem:[%s6] sm:$0x1]
      %v2580 = vlaneseq
      %v2581 = vshrl.u32 %v2580, 7
      %v2582 = vsub.s32 0, %v2581
      %v2583 = vrot.slane %v2578, %v2582
      %v2585 = vadd.f32 %v2576, %v2583
      %v2586 = vadd.f32 %v2577, %v2583
      %v2587 = vmax.f32 %v2585, 0.0
      %v2588 = vmax.f32 %v2586, 0.0
      %2589 = vst [vmem:[%s318] sm:$0xff] %v2587
      %2590 = vst [vmem:[%s318 + $0x8] sm:$0xff] %v2588
      %p2591 = scmp.lt.s32.totalorder %s20, 1
      %s2592 = scalar_select %p2591, %s20, 1
      %s2593 = smul.addr %s2592, 2
      %s2594 = smul.addr %s2593, 8
      %s2595 = scalar_lea.vmem %s7, %s2594
      %p2596 = scmp.lt.s32.totalorder %s20, 1
      %s2597 = scalar_select %p2596, %s20, 1
      %s2598 = smul.addr %s2597, 2
      %s2599 = smul.addr %s2598, 8
      %s2600 = scalar_lea.vmem %s8, %s2599
      // Predicated region
      $region49: #{dense_layer_forward.1} parent=47 // pred_check
        %p2601 = pneg %p190
      $region50: #{dense_layer_forward.1} parent=47 // pred_check_branch
        %2603 = sbr.rel (%p2601) target = $region52
      $region51: #{dense_layer_forward.1} parent=47 // pred_region
        _
      $region52: #{dense_layer_forward.1} parent=47 // pred_fallthru
        _
      // Predicated region
      $region53: #{dense_layer_forward.1} parent=47 // pred_check
        %p2604 = pneg %p216
      $region54: #{dense_layer_forward.1} parent=47 // pred_check_branch
        %2606 = sbr.rel (%p2604) target = $region56
      $region55: #{dense_layer_forward.1} parent=47 // pred_region
        _
      $region56: #{dense_layer_forward.1} parent=47 // pred_fallthru
        _
    $region48: #{dense_layer_forward.1} parent=5 // pred_fallthru
      _
    %p2607 = scmp.le.s32.totalorder 2, %s15
    // Predicated region
    $region57: #{dense_layer_forward.1} parent=5 // pred_check
      %p2608 = pneg %p2607
    $region58: #{dense_layer_forward.1} parent=5 // pred_check_branch
      %2610 = sbr.rel (%p2608) target = $region60
    $region59: #{dense_layer_forward.1} parent=5 // pred_region
      %s2611 = ssub.s32 %s15, 2
      // Predicated region
      $region61: #{dense_layer_forward.1} parent=59 // pred_check
        %p2612 = pneg %p196
      $region62: #{dense_layer_forward.1} parent=59 // pred_check_branch
        %2614 = sbr.rel (%p2612) target = $region64
      $region63: #{dense_layer_forward.1} parent=59 // pred_region
        %p2615 = scmp.lt.s32.totalorder %s21, 1
        %s2616 = scalar_select %p2615, %s21, 1
        %s2617 = smul.addr %s2616, 2
        %s2618 = smul.addr %s2617, 8
        %s2619 = scalar_lea.vmem %s7, %s2618
      $region64: #{dense_layer_forward.1} parent=59 // pred_fallthru
        _
      // Predicated region
      $region65: #{dense_layer_forward.1} parent=59 // pred_check
        %p2620 = pneg %p222
      $region66: #{dense_layer_forward.1} parent=59 // pred_check_branch
        %2622 = sbr.rel (%p2620) target = $region68
      $region67: #{dense_layer_forward.1} parent=59 // pred_region
        %p2623 = scmp.lt.s32.totalorder %s21, 1
        %s2624 = scalar_select %p2623, %s21, 1
        %s2625 = smul.addr %s2624, 2
        %s2626 = smul.addr %s2625, 8
        %s2627 = scalar_lea.vmem %s8, %s2626
      $region68: #{dense_layer_forward.1} parent=59 // pred_fallthru
        _
    $region60: #{dense_layer_forward.1} parent=5 // pred_fallthru
      _
  $region6: #{dense_layer_forward.1} parent=0 // loop_footer
    %s19 = sadd.s32 1, %s15
  $region7: #{dense_layer_forward.1} parent=0 // loop_footer_branch
    %14 = sbr.rel target = $region3
  $region8: #{dense_layer_forward.1} parent=0 // loop_exit
    _

</llo_original>
